<compile_context>
chip_gen: v7x
topology: tpu7x:2x2x1
jax: 0.10.0
libtpu: 0.0.40
codegen_flags: <defaults>
</compile_context>

<pallas_src>
import jax
import jax.numpy as jnp
from jax import lax
from jax.experimental import pallas as pl
from jax.experimental.pallas import tpu as pltpu


def macnet_kernel(seq_ref,    # [B, T]   int32 token ids (SMEM)
                  embed_ref,  # [Vin, E] embedding table (VMEM)
                  wih_f_ref,  # [E, 4H]  forward input projection
                  b_f_ref,    # [1, 4H]  forward bias (b_ih + b_hh)
                  whh_ref,    # [H, 4H]  forward recurrent weight
                  wih_b_ref,  # [E, 4H]  backward input projection
                  b_b_ref,    # [1, 4H]  backward bias
                  wcls_ref,   # [2H, V]  classifier weight (rows = [fwd | bwd])
                  bcls_ref,   # [1, V]   classifier bias
                  out_ref,    # [B, V]   log-probabilities
                  xs_ref):    # scratch [T*BP, E] gathered embeddings (time-major)
    B, T = seq_ref.shape
    G = wih_f_ref.shape[1]
    H = G // 4
    BP = xs_ref.shape[0] // T          # sublane-padded batch (8)

    # ---- embedding gather: time-major, batch padded to 8 sublanes ----------------
    xs_ref[...] = jnp.zeros_like(xs_ref)            # padded rows carry zeros (harmless)
    for t in range(T):
        for b in range(B):
            tok = seq_ref[b, t]                     # SMEM scalar read
            xs_ref[pl.ds(t * BP + b, 1), :] = embed_ref[pl.ds(tok, 1), :]

    x = jnp.tanh(xs_ref[...])                       # [T*BP, E], one EUP pass

    # ---- input projections hoisted out of the recurrence (off the serial path) ----
    gx_f = jnp.dot(x, wih_f_ref[...],
                   preferred_element_type=jnp.float32) + b_f_ref[...]       # [T*BP, 4H]
    x_last = x[(T - 1) * BP:T * BP, :]                                      # [BP, E]
    gx_b = jnp.dot(x_last, wih_b_ref[...],
                   preferred_element_type=jnp.float32) + b_b_ref[...]       # [BP, 4H]

    # tanh(z) = 2*sigmoid(2z) - 1 : pre-scale the g-lane block by 2 so a single
    # sigmoid EUP push per step covers i, f, g, o. Mask hoisted (no CSE of broadcasts).
    lane = lax.broadcasted_iota(jnp.int32, (1, G), 1)
    scale = jnp.where((lane >= 2 * H) & (lane < 3 * H),
                      jnp.float32(2.0), jnp.float32(1.0))                   # [1, 4H]

    # ---- forward-direction recurrence: fully unrolled, state carried in vregs ----
    whh = whh_ref[...]
    h = jnp.zeros((BP, H), jnp.float32)
    c = jnp.zeros((BP, H), jnp.float32)
    for t in range(T):
        gates = gx_f[t * BP:(t + 1) * BP, :] + jnp.dot(
            h, whh, preferred_element_type=jnp.float32)                     # [BP, 4H]
        sg = jax.nn.sigmoid(gates * scale)          # one 4H-wide EUP pass (i,f,g,o)
        i = sg[:, 0 * H:1 * H]
        f = sg[:, 1 * H:2 * H]
        g = 2.0 * sg[:, 2 * H:3 * H] - 1.0          # = tanh(gates_g), recovered on VPU
        o = sg[:, 3 * H:4 * H]
        c = f * c + i * g
        h = o * jnp.tanh(c)                         # second EUP pass

    # ---- backward direction: states[-1] only needs its first step (x[T-1], zero
    #      initial state) -> h@W_hh_b and f*c terms are identically zero ----------
    sgb = jax.nn.sigmoid(gx_b * scale)
    i_b = sgb[:, 0 * H:1 * H]
    g_b = 2.0 * sgb[:, 2 * H:3 * H] - 1.0
    o_b = sgb[:, 3 * H:4 * H]
    h_b = o_b * jnp.tanh(i_b * g_b)

    # ---- classify(states[-1]): split weight rows instead of concatenating features ----
    w = wcls_ref[...]
    logits = (jnp.dot(h, w[0:H, :], preferred_element_type=jnp.float32)
              + jnp.dot(h_b, w[H:2 * H, :], preferred_element_type=jnp.float32)
              + bcls_ref[...])                                              # [BP, V]

    # ---- log_softmax, store only the real batch rows (single masked store) --------
    m = jnp.max(logits, axis=-1, keepdims=True)
    shifted = logits - m
    lse = jnp.log(jnp.sum(jnp.exp(shifted), axis=-1, keepdims=True))
    out_ref[...] = (shifted - lse)[0:B, :]


def macnet_forward(seq, params):
    """seq: [B, T] int32 token ids.  Returns [B, V] float32 log-probabilities.

    Single pallas_call: no wrapper pre/post-processing ops at all.
    """
    B, T = seq.shape
    E = params["embed"].shape[1]
    V = params["wcls"].shape[1]
    B_PAD = 8                                        # sublane width

    smem = pl.BlockSpec(memory_space=pltpu.MemorySpace.SMEM)
    vmem = pl.BlockSpec(memory_space=pltpu.MemorySpace.VMEM)

    return pl.pallas_call(
        macnet_kernel,
        out_shape=jax.ShapeDtypeStruct((B, V), jnp.float32),
        in_specs=[smem] + [vmem] * 8,
        out_specs=vmem,
        scratch_shapes=[pltpu.VMEM((T * B_PAD, E), jnp.float32)],
    )(seq.astype(jnp.int32),
      params["embed"],
      params["wih_f"], params["b_f"], params["whh_f"],
      params["wih_b"], params["b_b"],
      params["wcls"], params["bcls"])


def reference_forward(seq, params):
    """Pure-JAX reference of the same forward pass (for numerical checking)."""
    H = params["whh_f"].shape[0]
    x = jnp.tanh(jnp.take(params["embed"], seq, axis=0))     # [B, T, E]
    B, T, _ = x.shape
    h = jnp.zeros((B, H), jnp.float32)
    c = jnp.zeros((B, H), jnp.float32)
    for t in range(T):
        gates = x[:, t] @ params["wih_f"] + h @ params["whh_f"] + params["b_f"]
        i = jax.nn.sigmoid(gates[:, :H])
        f = jax.nn.sigmoid(gates[:, H:2 * H])
        g = jnp.tanh(gates[:, 2 * H:3 * H])
        o = jax.nn.sigmoid(gates[:, 3 * H:])
        c = f * c + i * g
        h = o * jnp.tanh(c)
    gb = x[:, T - 1] @ params["wih_b"] + params["b_b"]
    ib = jax.nn.sigmoid(gb[:, :H])
    gg = jnp.tanh(gb[:, 2 * H:3 * H])
    ob = jax.nn.sigmoid(gb[:, 3 * H:])
    hb = ob * jnp.tanh(ib * gg)
    logits = jnp.concatenate([h, hb], axis=-1) @ params["wcls"] + params["bcls"]
    return jax.nn.log_softmax(logits, axis=-1)


def init_params(key, input_vocab, output_vocab, embed_dim, hidden_dim):
    ks = jax.random.split(key, 12)
    s = 1.0 / jnp.sqrt(hidden_dim)

    def u(k, shape):
        return jax.random.uniform(k, shape, jnp.float32, -s, s)

    return {
        "embed": jax.random.normal(ks[0], (input_vocab, embed_dim), jnp.float32),
        # forward direction (weights stored pre-transposed: [in, 4H], gate order i,f,g,o)
        "wih_f": u(ks[1], (embed_dim, 4 * hidden_dim)),
        "whh_f": u(ks[2], (hidden_dim, 4 * hidden_dim)),
        "b_f": u(ks[3], (1, 4 * hidden_dim)) + u(ks[4], (1, 4 * hidden_dim)),
        # reverse direction (whh_b exists in the PyTorch module but is dead for states[-1])
        "wih_b": u(ks[5], (embed_dim, 4 * hidden_dim)),
        "whh_b": u(ks[6], (hidden_dim, 4 * hidden_dim)),
        "b_b": u(ks[7], (1, 4 * hidden_dim)) + u(ks[8], (1, 4 * hidden_dim)),
        # classifier Linear(2H -> V), rows ordered [forward | backward]
        "wcls": u(ks[9], (2 * hidden_dim, output_vocab)),
        "bcls": u(ks[10], (1, output_vocab)),
    }


if __name__ == "__main__":
    INPUT_VOCAB = 20
    OUTPUT_VOCAB = 16
    EMBED_DIM = 32
    HIDDEN_DIM = 32
    B, T = 2, 8

    key = jax.random.PRNGKey(0)
    k_param, k_seq = jax.random.split(key)
    params = init_params(k_param, INPUT_VOCAB, OUTPUT_VOCAB, EMBED_DIM, HIDDEN_DIM)
    seq = jax.random.randint(k_seq, (B, T), 1, INPUT_VOCAB, dtype=jnp.int32)

    logp = jax.jit(macnet_forward)(seq, params)
    jax.block_until_ready(logp)

    assert logp.shape == (B, OUTPUT_VOCAB)
    assert bool(jnp.all(jnp.isfinite(logp)))
    # log_softmax rows should sum (in prob space) to ~1
    assert bool(jnp.allclose(jnp.sum(jnp.exp(logp), axis=-1), 1.0, atol=1e-4))
    # match the pure-JAX reference of the same module
    ref = reference_forward(seq, params)
    assert bool(jnp.allclose(logp, ref, atol=2e-3, rtol=2e-3))
    print("KERNEL_OK")
</pallas_src>

<mosaic_0001>
module attributes {stable_mosaic.version = 11 : i64} {
  func.func @macnet_kernel(%arg0: memref<2x8xi32, #tpu.memory_space<smem>>, %arg1: memref<20x32xf32, #tpu.memory_space<vmem>>, %arg2: memref<32x128xf32, #tpu.memory_space<vmem>>, %arg3: memref<1x128xf32, #tpu.memory_space<vmem>>, %arg4: memref<32x128xf32, #tpu.memory_space<vmem>>, %arg5: memref<32x128xf32, #tpu.memory_space<vmem>>, %arg6: memref<1x128xf32, #tpu.memory_space<vmem>>, %arg7: memref<64x16xf32, #tpu.memory_space<vmem>>, %arg8: memref<1x16xf32, #tpu.memory_space<vmem>>, %arg9: memref<2x16xf32, #tpu.memory_space<vmem>>, %arg10: memref<64x32xf32, #tpu.memory_space<vmem>>) attributes {dimension_semantics = [], scalar_prefetch = 0 : i64, scratch_operands = 1 : i64, tpu.core_type = #tpu.core_type<tc>} {
    %cst = arith.constant 0.000000e+00 : f32
    %0 = vector.broadcast %cst : f32 to vector<64x32xf32>
    %c0 = arith.constant 0 : index
    %c0_0 = arith.constant 0 : index
    %1 = vector.load %arg10[%c0, %c0_0] : memref<64x32xf32, #tpu.memory_space<vmem>>, vector<64x32xf32>
    tpu.vector_store %arg10[%c0, %c0_0], %0 {strides = array<i32>} : memref<64x32xf32, #tpu.memory_space<vmem>>, vector<64x32xf32>,
    %c0_1 = arith.constant 0 : index
    %c0_2 = arith.constant 0 : index
    %2 = memref.load %arg0[%c0_1, %c0_2] : memref<2x8xi32, #tpu.memory_space<smem>>
    %3 = arith.index_cast %2 : i32 to index
    %c0_3 = arith.constant 0 : index
    %4 = vector.load %arg1[%3, %c0_3] : memref<20x32xf32, #tpu.memory_space<vmem>>, vector<1x32xf32>
    %c0_4 = arith.constant 0 : index
    %c0_5 = arith.constant 0 : index
    %5 = vector.load %arg10[%c0_4, %c0_5] : memref<64x32xf32, #tpu.memory_space<vmem>>, vector<1x32xf32>
    tpu.vector_store %arg10[%c0_4, %c0_5], %4 {strides = array<i32>} : memref<64x32xf32, #tpu.memory_space<vmem>>, vector<1x32xf32>,
    %c1 = arith.constant 1 : index
    %c0_6 = arith.constant 0 : index
    %6 = memref.load %arg0[%c1, %c0_6] : memref<2x8xi32, #tpu.memory_space<smem>>
    %7 = arith.index_cast %6 : i32 to index
    %c0_7 = arith.constant 0 : index
    %8 = vector.load %arg1[%7, %c0_7] : memref<20x32xf32, #tpu.memory_space<vmem>>, vector<1x32xf32>
    %c1_8 = arith.constant 1 : index
    %c0_9 = arith.constant 0 : index
    %9 = vector.load %arg10[%c1_8, %c0_9] : memref<64x32xf32, #tpu.memory_space<vmem>>, vector<1x32xf32>
    tpu.vector_store %arg10[%c1_8, %c0_9], %8 {strides = array<i32>} : memref<64x32xf32, #tpu.memory_space<vmem>>, vector<1x32xf32>,
    %c0_10 = arith.constant 0 : index
    %c1_11 = arith.constant 1 : index
    %10 = memref.load %arg0[%c0_10, %c1_11] : memref<2x8xi32, #tpu.memory_space<smem>>
    %11 = arith.index_cast %10 : i32 to index
    %c0_12 = arith.constant 0 : index
    %12 = vector.load %arg1[%11, %c0_12] : memref<20x32xf32, #tpu.memory_space<vmem>>, vector<1x32xf32>
    %c8 = arith.constant 8 : index
    %c0_13 = arith.constant 0 : index
    %13 = vector.load %arg10[%c8, %c0_13] : memref<64x32xf32, #tpu.memory_space<vmem>>, vector<1x32xf32>
    tpu.vector_store %arg10[%c8, %c0_13], %12 {strides = array<i32>} : memref<64x32xf32, #tpu.memory_space<vmem>>, vector<1x32xf32>,
    %c1_14 = arith.constant 1 : index
    %c1_15 = arith.constant 1 : index
    %14 = memref.load %arg0[%c1_14, %c1_15] : memref<2x8xi32, #tpu.memory_space<smem>>
    %15 = arith.index_cast %14 : i32 to index
    %c0_16 = arith.constant 0 : index
    %16 = vector.load %arg1[%15, %c0_16] : memref<20x32xf32, #tpu.memory_space<vmem>>, vector<1x32xf32>
    %c9 = arith.constant 9 : index
    %c0_17 = arith.constant 0 : index
    %17 = vector.load %arg10[%c9, %c0_17] : memref<64x32xf32, #tpu.memory_space<vmem>>, vector<1x32xf32>
    tpu.vector_store %arg10[%c9, %c0_17], %16 {strides = array<i32>} : memref<64x32xf32, #tpu.memory_space<vmem>>, vector<1x32xf32>,
    %c0_18 = arith.constant 0 : index
    %c2 = arith.constant 2 : index
    %18 = memref.load %arg0[%c0_18, %c2] : memref<2x8xi32, #tpu.memory_space<smem>>
    %19 = arith.index_cast %18 : i32 to index
    %c0_19 = arith.constant 0 : index
    %20 = vector.load %arg1[%19, %c0_19] : memref<20x32xf32, #tpu.memory_space<vmem>>, vector<1x32xf32>
    %c16 = arith.constant 16 : index
    %c0_20 = arith.constant 0 : index
    %21 = vector.load %arg10[%c16, %c0_20] : memref<64x32xf32, #tpu.memory_space<vmem>>, vector<1x32xf32>
    tpu.vector_store %arg10[%c16, %c0_20], %20 {strides = array<i32>} : memref<64x32xf32, #tpu.memory_space<vmem>>, vector<1x32xf32>,
    %c1_21 = arith.constant 1 : index
    %c2_22 = arith.constant 2 : index
    %22 = memref.load %arg0[%c1_21, %c2_22] : memref<2x8xi32, #tpu.memory_space<smem>>
    %23 = arith.index_cast %22 : i32 to index
    %c0_23 = arith.constant 0 : index
    %24 = vector.load %arg1[%23, %c0_23] : memref<20x32xf32, #tpu.memory_space<vmem>>, vector<1x32xf32>
    %c17 = arith.constant 17 : index
    %c0_24 = arith.constant 0 : index
    %25 = vector.load %arg10[%c17, %c0_24] : memref<64x32xf32, #tpu.memory_space<vmem>>, vector<1x32xf32>
    tpu.vector_store %arg10[%c17, %c0_24], %24 {strides = array<i32>} : memref<64x32xf32, #tpu.memory_space<vmem>>, vector<1x32xf32>,
    %c0_25 = arith.constant 0 : index
    %c3 = arith.constant 3 : index
    %26 = memref.load %arg0[%c0_25, %c3] : memref<2x8xi32, #tpu.memory_space<smem>>
    %27 = arith.index_cast %26 : i32 to index
    %c0_26 = arith.constant 0 : index
    %28 = vector.load %arg1[%27, %c0_26] : memref<20x32xf32, #tpu.memory_space<vmem>>, vector<1x32xf32>
    %c24 = arith.constant 24 : index
    %c0_27 = arith.constant 0 : index
    %29 = vector.load %arg10[%c24, %c0_27] : memref<64x32xf32, #tpu.memory_space<vmem>>, vector<1x32xf32>
    tpu.vector_store %arg10[%c24, %c0_27], %28 {strides = array<i32>} : memref<64x32xf32, #tpu.memory_space<vmem>>, vector<1x32xf32>,
    %c1_28 = arith.constant 1 : index
    %c3_29 = arith.constant 3 : index
    %30 = memref.load %arg0[%c1_28, %c3_29] : memref<2x8xi32, #tpu.memory_space<smem>>
    %31 = arith.index_cast %30 : i32 to index
    %c0_30 = arith.constant 0 : index
    %32 = vector.load %arg1[%31, %c0_30] : memref<20x32xf32, #tpu.memory_space<vmem>>, vector<1x32xf32>
    %c25 = arith.constant 25 : index
    %c0_31 = arith.constant 0 : index
    %33 = vector.load %arg10[%c25, %c0_31] : memref<64x32xf32, #tpu.memory_space<vmem>>, vector<1x32xf32>
    tpu.vector_store %arg10[%c25, %c0_31], %32 {strides = array<i32>} : memref<64x32xf32, #tpu.memory_space<vmem>>, vector<1x32xf32>,
    %c0_32 = arith.constant 0 : index
    %c4 = arith.constant 4 : index
    %34 = memref.load %arg0[%c0_32, %c4] : memref<2x8xi32, #tpu.memory_space<smem>>
    %35 = arith.index_cast %34 : i32 to index
    %c0_33 = arith.constant 0 : index
    %36 = vector.load %arg1[%35, %c0_33] : memref<20x32xf32, #tpu.memory_space<vmem>>, vector<1x32xf32>
    %c32 = arith.constant 32 : index
    %c0_34 = arith.constant 0 : index
    %37 = vector.load %arg10[%c32, %c0_34] : memref<64x32xf32, #tpu.memory_space<vmem>>, vector<1x32xf32>
    tpu.vector_store %arg10[%c32, %c0_34], %36 {strides = array<i32>} : memref<64x32xf32, #tpu.memory_space<vmem>>, vector<1x32xf32>,
    %c1_35 = arith.constant 1 : index
    %c4_36 = arith.constant 4 : index
    %38 = memref.load %arg0[%c1_35, %c4_36] : memref<2x8xi32, #tpu.memory_space<smem>>
    %39 = arith.index_cast %38 : i32 to index
    %c0_37 = arith.constant 0 : index
    %40 = vector.load %arg1[%39, %c0_37] : memref<20x32xf32, #tpu.memory_space<vmem>>, vector<1x32xf32>
    %c33 = arith.constant 33 : index
    %c0_38 = arith.constant 0 : index
    %41 = vector.load %arg10[%c33, %c0_38] : memref<64x32xf32, #tpu.memory_space<vmem>>, vector<1x32xf32>
    tpu.vector_store %arg10[%c33, %c0_38], %40 {strides = array<i32>} : memref<64x32xf32, #tpu.memory_space<vmem>>, vector<1x32xf32>,
    %c0_39 = arith.constant 0 : index
    %c5 = arith.constant 5 : index
    %42 = memref.load %arg0[%c0_39, %c5] : memref<2x8xi32, #tpu.memory_space<smem>>
    %43 = arith.index_cast %42 : i32 to index
    %c0_40 = arith.constant 0 : index
    %44 = vector.load %arg1[%43, %c0_40] : memref<20x32xf32, #tpu.memory_space<vmem>>, vector<1x32xf32>
    %c40 = arith.constant 40 : index
    %c0_41 = arith.constant 0 : index
    %45 = vector.load %arg10[%c40, %c0_41] : memref<64x32xf32, #tpu.memory_space<vmem>>, vector<1x32xf32>
    tpu.vector_store %arg10[%c40, %c0_41], %44 {strides = array<i32>} : memref<64x32xf32, #tpu.memory_space<vmem>>, vector<1x32xf32>,
    %c1_42 = arith.constant 1 : index
    %c5_43 = arith.constant 5 : index
    %46 = memref.load %arg0[%c1_42, %c5_43] : memref<2x8xi32, #tpu.memory_space<smem>>
    %47 = arith.index_cast %46 : i32 to index
    %c0_44 = arith.constant 0 : index
    %48 = vector.load %arg1[%47, %c0_44] : memref<20x32xf32, #tpu.memory_space<vmem>>, vector<1x32xf32>
    %c41 = arith.constant 41 : index
    %c0_45 = arith.constant 0 : index
    %49 = vector.load %arg10[%c41, %c0_45] : memref<64x32xf32, #tpu.memory_space<vmem>>, vector<1x32xf32>
    tpu.vector_store %arg10[%c41, %c0_45], %48 {strides = array<i32>} : memref<64x32xf32, #tpu.memory_space<vmem>>, vector<1x32xf32>,
    %c0_46 = arith.constant 0 : index
    %c6 = arith.constant 6 : index
    %50 = memref.load %arg0[%c0_46, %c6] : memref<2x8xi32, #tpu.memory_space<smem>>
    %51 = arith.index_cast %50 : i32 to index
    %c0_47 = arith.constant 0 : index
    %52 = vector.load %arg1[%51, %c0_47] : memref<20x32xf32, #tpu.memory_space<vmem>>, vector<1x32xf32>
    %c48 = arith.constant 48 : index
    %c0_48 = arith.constant 0 : index
    %53 = vector.load %arg10[%c48, %c0_48] : memref<64x32xf32, #tpu.memory_space<vmem>>, vector<1x32xf32>
    tpu.vector_store %arg10[%c48, %c0_48], %52 {strides = array<i32>} : memref<64x32xf32, #tpu.memory_space<vmem>>, vector<1x32xf32>,
    %c1_49 = arith.constant 1 : index
    %c6_50 = arith.constant 6 : index
    %54 = memref.load %arg0[%c1_49, %c6_50] : memref<2x8xi32, #tpu.memory_space<smem>>
    %55 = arith.index_cast %54 : i32 to index
    %c0_51 = arith.constant 0 : index
    %56 = vector.load %arg1[%55, %c0_51] : memref<20x32xf32, #tpu.memory_space<vmem>>, vector<1x32xf32>
    %c49 = arith.constant 49 : index
    %c0_52 = arith.constant 0 : index
    %57 = vector.load %arg10[%c49, %c0_52] : memref<64x32xf32, #tpu.memory_space<vmem>>, vector<1x32xf32>
    tpu.vector_store %arg10[%c49, %c0_52], %56 {strides = array<i32>} : memref<64x32xf32, #tpu.memory_space<vmem>>, vector<1x32xf32>,
    %c0_53 = arith.constant 0 : index
    %c7 = arith.constant 7 : index
    %58 = memref.load %arg0[%c0_53, %c7] : memref<2x8xi32, #tpu.memory_space<smem>>
    %59 = arith.index_cast %58 : i32 to index
    %c0_54 = arith.constant 0 : index
    %60 = vector.load %arg1[%59, %c0_54] : memref<20x32xf32, #tpu.memory_space<vmem>>, vector<1x32xf32>
    %c56 = arith.constant 56 : index
    %c0_55 = arith.constant 0 : index
    %61 = vector.load %arg10[%c56, %c0_55] : memref<64x32xf32, #tpu.memory_space<vmem>>, vector<1x32xf32>
    tpu.vector_store %arg10[%c56, %c0_55], %60 {strides = array<i32>} : memref<64x32xf32, #tpu.memory_space<vmem>>, vector<1x32xf32>,
    %c1_56 = arith.constant 1 : index
    %c7_57 = arith.constant 7 : index
    %62 = memref.load %arg0[%c1_56, %c7_57] : memref<2x8xi32, #tpu.memory_space<smem>>
    %63 = arith.index_cast %62 : i32 to index
    %c0_58 = arith.constant 0 : index
    %64 = vector.load %arg1[%63, %c0_58] : memref<20x32xf32, #tpu.memory_space<vmem>>, vector<1x32xf32>
    %c57 = arith.constant 57 : index
    %c0_59 = arith.constant 0 : index
    %65 = vector.load %arg10[%c57, %c0_59] : memref<64x32xf32, #tpu.memory_space<vmem>>, vector<1x32xf32>
    tpu.vector_store %arg10[%c57, %c0_59], %64 {strides = array<i32>} : memref<64x32xf32, #tpu.memory_space<vmem>>, vector<1x32xf32>,
    %c0_60 = arith.constant 0 : index
    %c0_61 = arith.constant 0 : index
    %66 = vector.load %arg10[%c0_60, %c0_61] : memref<64x32xf32, #tpu.memory_space<vmem>>, vector<64x32xf32>
    %67 = math.tanh %66 : vector<64x32xf32>
    %c0_62 = arith.constant 0 : index
    %c0_63 = arith.constant 0 : index
    %68 = vector.load %arg2[%c0_62, %c0_63] : memref<32x128xf32, #tpu.memory_space<vmem>>, vector<32x128xf32>
    %cst_64 = arith.constant dense<0.000000e+00> : vector<64x128xf32>
    %69 = tpu.matmul %67, %68, %cst_64 {dimension_numbers = #tpu.dot_dimension_numbers<[1], [0], [0], [1], [0, 0, 1, 1], [], []>} : vector<64x32xf32>, vector<32x128xf32>, vector<64x128xf32> -> vector<64x128xf32>
    %c0_65 = arith.constant 0 : index
    %c0_66 = arith.constant 0 : index
    %70 = vector.load %arg3[%c0_65, %c0_66] : memref<1x128xf32, #tpu.memory_space<vmem>>, vector<1x128xf32>
    %71 = vector.broadcast %70 : vector<1x128xf32> to vector<64x128xf32>
    %72 = arith.addf %69, %71 : vector<64x128xf32>
    %73 = vector.extract_strided_slice %67 {offsets = [56, 0], sizes = [8, 32], strides = [1, 1]} : vector<64x32xf32> to vector<8x32xf32>
    %c0_67 = arith.constant 0 : index
    %c0_68 = arith.constant 0 : index
    %74 = vector.load %arg5[%c0_67, %c0_68] : memref<32x128xf32, #tpu.memory_space<vmem>>, vector<32x128xf32>
    %cst_69 = arith.constant dense<0.000000e+00> : vector<8x128xf32>
    %75 = tpu.matmul %73, %74, %cst_69 {dimension_numbers = #tpu.dot_dimension_numbers<[1], [0], [0], [1], [0, 0, 1, 1], [], []>} : vector<8x32xf32>, vector<32x128xf32>, vector<8x128xf32> -> vector<8x128xf32>
    %c0_70 = arith.constant 0 : index
    %c0_71 = arith.constant 0 : index
    %76 = vector.load %arg6[%c0_70, %c0_71] : memref<1x128xf32, #tpu.memory_space<vmem>>, vector<1x128xf32>
    %77 = vector.broadcast %76 : vector<1x128xf32> to vector<8x128xf32>
    %78 = arith.addf %75, %77 : vector<8x128xf32>
    %79 = tpu.iota {dimensions = array<i32: 1>} : vector<1x128xi32>
    %c64_i32 = arith.constant 64 : i32
    %80 = vector.broadcast %c64_i32 : i32 to vector<1x128xi32>
    %81 = arith.cmpi sge, %79, %80 : vector<1x128xi32>
    %c96_i32 = arith.constant 96 : i32
    %82 = vector.broadcast %c96_i32 : i32 to vector<1x128xi32>
    %83 = arith.cmpi slt, %79, %82 : vector<1x128xi32>
    %84 = arith.andi %81, %83 : vector<1x128xi1>
    %cst_72 = arith.constant 2.000000e+00 : f32
    %cst_73 = arith.constant 1.000000e+00 : f32
    %85 = vector.broadcast %cst_72 : f32 to vector<1x128xf32>
    %86 = vector.broadcast %cst_73 : f32 to vector<1x128xf32>
    %87 = arith.select %84, %85, %86 : vector<1x128xi1>, vector<1x128xf32>
    %c0_74 = arith.constant 0 : index
    %c0_75 = arith.constant 0 : index
    %88 = vector.load %arg4[%c0_74, %c0_75] : memref<32x128xf32, #tpu.memory_space<vmem>>, vector<32x128xf32>
    %cst_76 = arith.constant 0.000000e+00 : f32
    %89 = vector.broadcast %cst_76 : f32 to vector<8x32xf32>
    %cst_77 = arith.constant 0.000000e+00 : f32
    %90 = vector.broadcast %cst_77 : f32 to vector<8x32xf32>
    %91 = vector.extract_strided_slice %72 {offsets = [0, 0], sizes = [8, 128], strides = [1, 1]} : vector<64x128xf32> to vector<8x128xf32>
    %cst_78 = arith.constant dense<0.000000e+00> : vector<8x128xf32>
    %92 = tpu.matmul %89, %88, %cst_78 {dimension_numbers = #tpu.dot_dimension_numbers<[1], [0], [0], [1], [0, 0, 1, 1], [], []>} : vector<8x32xf32>, vector<32x128xf32>, vector<8x128xf32> -> vector<8x128xf32>
    %93 = arith.addf %91, %92 : vector<8x128xf32>
    %94 = vector.broadcast %87 : vector<1x128xf32> to vector<8x128xf32>
    %95 = arith.mulf %93, %94 : vector<8x128xf32>
    %96 = arith.negf %95 : vector<8x128xf32>
    %97 = math.exp %96 : vector<8x128xf32>
    %cst_79 = arith.constant 1.000000e+00 : f32
    %98 = vector.broadcast %cst_79 : f32 to vector<8x128xf32>
    %99 = arith.addf %98, %97 : vector<8x128xf32>
    %100 = arith.divf %98, %99 : vector<8x128xf32>
    %101 = vector.extract_strided_slice %100 {offsets = [0, 0], sizes = [8, 32], strides = [1, 1]} : vector<8x128xf32> to vector<8x32xf32>
    %102 = vector.extract_strided_slice %100 {offsets = [0, 32], sizes = [8, 32], strides = [1, 1]} : vector<8x128xf32> to vector<8x32xf32>
    %103 = vector.extract_strided_slice %100 {offsets = [0, 64], sizes = [8, 32], strides = [1, 1]} : vector<8x128xf32> to vector<8x32xf32>
    %cst_80 = arith.constant 2.000000e+00 : f32
    %104 = vector.broadcast %cst_80 : f32 to vector<8x32xf32>
    %105 = arith.mulf %104, %103 : vector<8x32xf32>
    %cst_81 = arith.constant 1.000000e+00 : f32
    %106 = vector.broadcast %cst_81 : f32 to vector<8x32xf32>
    %107 = arith.subf %105, %106 : vector<8x32xf32>
    %108 = vector.extract_strided_slice %100 {offsets = [0, 96], sizes = [8, 32], strides = [1, 1]} : vector<8x128xf32> to vector<8x32xf32>
    %109 = arith.mulf %102, %90 : vector<8x32xf32>
    %110 = arith.mulf %101, %107 : vector<8x32xf32>
    %111 = arith.addf %109, %110 : vector<8x32xf32>
    %112 = math.tanh %111 : vector<8x32xf32>
    %113 = arith.mulf %108, %112 : vector<8x32xf32>
    %114 = vector.extract_strided_slice %72 {offsets = [8, 0], sizes = [8, 128], strides = [1, 1]} : vector<64x128xf32> to vector<8x128xf32>
    %cst_82 = arith.constant dense<0.000000e+00> : vector<8x128xf32>
    %115 = tpu.matmul %113, %88, %cst_82 {dimension_numbers = #tpu.dot_dimension_numbers<[1], [0], [0], [1], [0, 0, 1, 1], [], []>} : vector<8x32xf32>, vector<32x128xf32>, vector<8x128xf32> -> vector<8x128xf32>
    %116 = arith.addf %114, %115 : vector<8x128xf32>
    %117 = vector.broadcast %87 : vector<1x128xf32> to vector<8x128xf32>
    %118 = arith.mulf %116, %117 : vector<8x128xf32>
    %119 = arith.negf %118 : vector<8x128xf32>
    %120 = math.exp %119 : vector<8x128xf32>
    %cst_83 = arith.constant 1.000000e+00 : f32
    %121 = vector.broadcast %cst_83 : f32 to vector<8x128xf32>
    %122 = arith.addf %121, %120 : vector<8x128xf32>
    %123 = arith.divf %121, %122 : vector<8x128xf32>
    %124 = vector.extract_strided_slice %123 {offsets = [0, 0], sizes = [8, 32], strides = [1, 1]} : vector<8x128xf32> to vector<8x32xf32>
    %125 = vector.extract_strided_slice %123 {offsets = [0, 32], sizes = [8, 32], strides = [1, 1]} : vector<8x128xf32> to vector<8x32xf32>
    %126 = vector.extract_strided_slice %123 {offsets = [0, 64], sizes = [8, 32], strides = [1, 1]} : vector<8x128xf32> to vector<8x32xf32>
    %cst_84 = arith.constant 2.000000e+00 : f32
    %127 = vector.broadcast %cst_84 : f32 to vector<8x32xf32>
    %128 = arith.mulf %127, %126 : vector<8x32xf32>
    %cst_85 = arith.constant 1.000000e+00 : f32
    %129 = vector.broadcast %cst_85 : f32 to vector<8x32xf32>
    %130 = arith.subf %128, %129 : vector<8x32xf32>
    %131 = vector.extract_strided_slice %123 {offsets = [0, 96], sizes = [8, 32], strides = [1, 1]} : vector<8x128xf32> to vector<8x32xf32>
    %132 = arith.mulf %125, %111 : vector<8x32xf32>
    %133 = arith.mulf %124, %130 : vector<8x32xf32>
    %134 = arith.addf %132, %133 : vector<8x32xf32>
    %135 = math.tanh %134 : vector<8x32xf32>
    %136 = arith.mulf %131, %135 : vector<8x32xf32>
    %137 = vector.extract_strided_slice %72 {offsets = [16, 0], sizes = [8, 128], strides = [1, 1]} : vector<64x128xf32> to vector<8x128xf32>
    %cst_86 = arith.constant dense<0.000000e+00> : vector<8x128xf32>
    %138 = tpu.matmul %136, %88, %cst_86 {dimension_numbers = #tpu.dot_dimension_numbers<[1], [0], [0], [1], [0, 0, 1, 1], [], []>} : vector<8x32xf32>, vector<32x128xf32>, vector<8x128xf32> -> vector<8x128xf32>
    %139 = arith.addf %137, %138 : vector<8x128xf32>
    %140 = vector.broadcast %87 : vector<1x128xf32> to vector<8x128xf32>
    %141 = arith.mulf %139, %140 : vector<8x128xf32>
    %142 = arith.negf %141 : vector<8x128xf32>
    %143 = math.exp %142 : vector<8x128xf32>
    %cst_87 = arith.constant 1.000000e+00 : f32
    %144 = vector.broadcast %cst_87 : f32 to vector<8x128xf32>
    %145 = arith.addf %144, %143 : vector<8x128xf32>
    %146 = arith.divf %144, %145 : vector<8x128xf32>
    %147 = vector.extract_strided_slice %146 {offsets = [0, 0], sizes = [8, 32], strides = [1, 1]} : vector<8x128xf32> to vector<8x32xf32>
    %148 = vector.extract_strided_slice %146 {offsets = [0, 32], sizes = [8, 32], strides = [1, 1]} : vector<8x128xf32> to vector<8x32xf32>
    %149 = vector.extract_strided_slice %146 {offsets = [0, 64], sizes = [8, 32], strides = [1, 1]} : vector<8x128xf32> to vector<8x32xf32>
    %cst_88 = arith.constant 2.000000e+00 : f32
    %150 = vector.broadcast %cst_88 : f32 to vector<8x32xf32>
    %151 = arith.mulf %150, %149 : vector<8x32xf32>
    %cst_89 = arith.constant 1.000000e+00 : f32
    %152 = vector.broadcast %cst_89 : f32 to vector<8x32xf32>
    %153 = arith.subf %151, %152 : vector<8x32xf32>
    %154 = vector.extract_strided_slice %146 {offsets = [0, 96], sizes = [8, 32], strides = [1, 1]} : vector<8x128xf32> to vector<8x32xf32>
    %155 = arith.mulf %148, %134 : vector<8x32xf32>
    %156 = arith.mulf %147, %153 : vector<8x32xf32>
    %157 = arith.addf %155, %156 : vector<8x32xf32>
    %158 = math.tanh %157 : vector<8x32xf32>
    %159 = arith.mulf %154, %158 : vector<8x32xf32>
    %160 = vector.extract_strided_slice %72 {offsets = [24, 0], sizes = [8, 128], strides = [1, 1]} : vector<64x128xf32> to vector<8x128xf32>
    %cst_90 = arith.constant dense<0.000000e+00> : vector<8x128xf32>
    %161 = tpu.matmul %159, %88, %cst_90 {dimension_numbers = #tpu.dot_dimension_numbers<[1], [0], [0], [1], [0, 0, 1, 1], [], []>} : vector<8x32xf32>, vector<32x128xf32>, vector<8x128xf32> -> vector<8x128xf32>
    %162 = arith.addf %160, %161 : vector<8x128xf32>
    %163 = vector.broadcast %87 : vector<1x128xf32> to vector<8x128xf32>
    %164 = arith.mulf %162, %163 : vector<8x128xf32>
    %165 = arith.negf %164 : vector<8x128xf32>
    %166 = math.exp %165 : vector<8x128xf32>
    %cst_91 = arith.constant 1.000000e+00 : f32
    %167 = vector.broadcast %cst_91 : f32 to vector<8x128xf32>
    %168 = arith.addf %167, %166 : vector<8x128xf32>
    %169 = arith.divf %167, %168 : vector<8x128xf32>
    %170 = vector.extract_strided_slice %169 {offsets = [0, 0], sizes = [8, 32], strides = [1, 1]} : vector<8x128xf32> to vector<8x32xf32>
    %171 = vector.extract_strided_slice %169 {offsets = [0, 32], sizes = [8, 32], strides = [1, 1]} : vector<8x128xf32> to vector<8x32xf32>
    %172 = vector.extract_strided_slice %169 {offsets = [0, 64], sizes = [8, 32], strides = [1, 1]} : vector<8x128xf32> to vector<8x32xf32>
    %cst_92 = arith.constant 2.000000e+00 : f32
    %173 = vector.broadcast %cst_92 : f32 to vector<8x32xf32>
    %174 = arith.mulf %173, %172 : vector<8x32xf32>
    %cst_93 = arith.constant 1.000000e+00 : f32
    %175 = vector.broadcast %cst_93 : f32 to vector<8x32xf32>
    %176 = arith.subf %174, %175 : vector<8x32xf32>
    %177 = vector.extract_strided_slice %169 {offsets = [0, 96], sizes = [8, 32], strides = [1, 1]} : vector<8x128xf32> to vector<8x32xf32>
    %178 = arith.mulf %171, %157 : vector<8x32xf32>
    %179 = arith.mulf %170, %176 : vector<8x32xf32>
    %180 = arith.addf %178, %179 : vector<8x32xf32>
    %181 = math.tanh %180 : vector<8x32xf32>
    %182 = arith.mulf %177, %181 : vector<8x32xf32>
    %183 = vector.extract_strided_slice %72 {offsets = [32, 0], sizes = [8, 128], strides = [1, 1]} : vector<64x128xf32> to vector<8x128xf32>
    %cst_94 = arith.constant dense<0.000000e+00> : vector<8x128xf32>
    %184 = tpu.matmul %182, %88, %cst_94 {dimension_numbers = #tpu.dot_dimension_numbers<[1], [0], [0], [1], [0, 0, 1, 1], [], []>} : vector<8x32xf32>, vector<32x128xf32>, vector<8x128xf32> -> vector<8x128xf32>
    %185 = arith.addf %183, %184 : vector<8x128xf32>
    %186 = vector.broadcast %87 : vector<1x128xf32> to vector<8x128xf32>
    %187 = arith.mulf %185, %186 : vector<8x128xf32>
    %188 = arith.negf %187 : vector<8x128xf32>
    %189 = math.exp %188 : vector<8x128xf32>
    %cst_95 = arith.constant 1.000000e+00 : f32
    %190 = vector.broadcast %cst_95 : f32 to vector<8x128xf32>
    %191 = arith.addf %190, %189 : vector<8x128xf32>
    %192 = arith.divf %190, %191 : vector<8x128xf32>
    %193 = vector.extract_strided_slice %192 {offsets = [0, 0], sizes = [8, 32], strides = [1, 1]} : vector<8x128xf32> to vector<8x32xf32>
    %194 = vector.extract_strided_slice %192 {offsets = [0, 32], sizes = [8, 32], strides = [1, 1]} : vector<8x128xf32> to vector<8x32xf32>
    %195 = vector.extract_strided_slice %192 {offsets = [0, 64], sizes = [8, 32], strides = [1, 1]} : vector<8x128xf32> to vector<8x32xf32>
    %cst_96 = arith.constant 2.000000e+00 : f32
    %196 = vector.broadcast %cst_96 : f32 to vector<8x32xf32>
    %197 = arith.mulf %196, %195 : vector<8x32xf32>
    %cst_97 = arith.constant 1.000000e+00 : f32
    %198 = vector.broadcast %cst_97 : f32 to vector<8x32xf32>
    %199 = arith.subf %197, %198 : vector<8x32xf32>
    %200 = vector.extract_strided_slice %192 {offsets = [0, 96], sizes = [8, 32], strides = [1, 1]} : vector<8x128xf32> to vector<8x32xf32>
    %201 = arith.mulf %194, %180 : vector<8x32xf32>
    %202 = arith.mulf %193, %199 : vector<8x32xf32>
    %203 = arith.addf %201, %202 : vector<8x32xf32>
    %204 = math.tanh %203 : vector<8x32xf32>
    %205 = arith.mulf %200, %204 : vector<8x32xf32>
    %206 = vector.extract_strided_slice %72 {offsets = [40, 0], sizes = [8, 128], strides = [1, 1]} : vector<64x128xf32> to vector<8x128xf32>
    %cst_98 = arith.constant dense<0.000000e+00> : vector<8x128xf32>
    %207 = tpu.matmul %205, %88, %cst_98 {dimension_numbers = #tpu.dot_dimension_numbers<[1], [0], [0], [1], [0, 0, 1, 1], [], []>} : vector<8x32xf32>, vector<32x128xf32>, vector<8x128xf32> -> vector<8x128xf32>
    %208 = arith.addf %206, %207 : vector<8x128xf32>
    %209 = vector.broadcast %87 : vector<1x128xf32> to vector<8x128xf32>
    %210 = arith.mulf %208, %209 : vector<8x128xf32>
    %211 = arith.negf %210 : vector<8x128xf32>
    %212 = math.exp %211 : vector<8x128xf32>
    %cst_99 = arith.constant 1.000000e+00 : f32
    %213 = vector.broadcast %cst_99 : f32 to vector<8x128xf32>
    %214 = arith.addf %213, %212 : vector<8x128xf32>
    %215 = arith.divf %213, %214 : vector<8x128xf32>
    %216 = vector.extract_strided_slice %215 {offsets = [0, 0], sizes = [8, 32], strides = [1, 1]} : vector<8x128xf32> to vector<8x32xf32>
    %217 = vector.extract_strided_slice %215 {offsets = [0, 32], sizes = [8, 32], strides = [1, 1]} : vector<8x128xf32> to vector<8x32xf32>
    %218 = vector.extract_strided_slice %215 {offsets = [0, 64], sizes = [8, 32], strides = [1, 1]} : vector<8x128xf32> to vector<8x32xf32>
    %cst_100 = arith.constant 2.000000e+00 : f32
    %219 = vector.broadcast %cst_100 : f32 to vector<8x32xf32>
    %220 = arith.mulf %219, %218 : vector<8x32xf32>
    %cst_101 = arith.constant 1.000000e+00 : f32
    %221 = vector.broadcast %cst_101 : f32 to vector<8x32xf32>
    %222 = arith.subf %220, %221 : vector<8x32xf32>
    %223 = vector.extract_strided_slice %215 {offsets = [0, 96], sizes = [8, 32], strides = [1, 1]} : vector<8x128xf32> to vector<8x32xf32>
    %224 = arith.mulf %217, %203 : vector<8x32xf32>
    %225 = arith.mulf %216, %222 : vector<8x32xf32>
    %226 = arith.addf %224, %225 : vector<8x32xf32>
    %227 = math.tanh %226 : vector<8x32xf32>
    %228 = arith.mulf %223, %227 : vector<8x32xf32>
    %229 = vector.extract_strided_slice %72 {offsets = [48, 0], sizes = [8, 128], strides = [1, 1]} : vector<64x128xf32> to vector<8x128xf32>
    %cst_102 = arith.constant dense<0.000000e+00> : vector<8x128xf32>
    %230 = tpu.matmul %228, %88, %cst_102 {dimension_numbers = #tpu.dot_dimension_numbers<[1], [0], [0], [1], [0, 0, 1, 1], [], []>} : vector<8x32xf32>, vector<32x128xf32>, vector<8x128xf32> -> vector<8x128xf32>
    %231 = arith.addf %229, %230 : vector<8x128xf32>
    %232 = vector.broadcast %87 : vector<1x128xf32> to vector<8x128xf32>
    %233 = arith.mulf %231, %232 : vector<8x128xf32>
    %234 = arith.negf %233 : vector<8x128xf32>
    %235 = math.exp %234 : vector<8x128xf32>
    %cst_103 = arith.constant 1.000000e+00 : f32
    %236 = vector.broadcast %cst_103 : f32 to vector<8x128xf32>
    %237 = arith.addf %236, %235 : vector<8x128xf32>
    %238 = arith.divf %236, %237 : vector<8x128xf32>
    %239 = vector.extract_strided_slice %238 {offsets = [0, 0], sizes = [8, 32], strides = [1, 1]} : vector<8x128xf32> to vector<8x32xf32>
    %240 = vector.extract_strided_slice %238 {offsets = [0, 32], sizes = [8, 32], strides = [1, 1]} : vector<8x128xf32> to vector<8x32xf32>
    %241 = vector.extract_strided_slice %238 {offsets = [0, 64], sizes = [8, 32], strides = [1, 1]} : vector<8x128xf32> to vector<8x32xf32>
    %cst_104 = arith.constant 2.000000e+00 : f32
    %242 = vector.broadcast %cst_104 : f32 to vector<8x32xf32>
    %243 = arith.mulf %242, %241 : vector<8x32xf32>
    %cst_105 = arith.constant 1.000000e+00 : f32
    %244 = vector.broadcast %cst_105 : f32 to vector<8x32xf32>
    %245 = arith.subf %243, %244 : vector<8x32xf32>
    %246 = vector.extract_strided_slice %238 {offsets = [0, 96], sizes = [8, 32], strides = [1, 1]} : vector<8x128xf32> to vector<8x32xf32>
    %247 = arith.mulf %240, %226 : vector<8x32xf32>
    %248 = arith.mulf %239, %245 : vector<8x32xf32>
    %249 = arith.addf %247, %248 : vector<8x32xf32>
    %250 = math.tanh %249 : vector<8x32xf32>
    %251 = arith.mulf %246, %250 : vector<8x32xf32>
    %252 = vector.extract_strided_slice %72 {offsets = [56, 0], sizes = [8, 128], strides = [1, 1]} : vector<64x128xf32> to vector<8x128xf32>
    %cst_106 = arith.constant dense<0.000000e+00> : vector<8x128xf32>
    %253 = tpu.matmul %251, %88, %cst_106 {dimension_numbers = #tpu.dot_dimension_numbers<[1], [0], [0], [1], [0, 0, 1, 1], [], []>} : vector<8x32xf32>, vector<32x128xf32>, vector<8x128xf32> -> vector<8x128xf32>
    %254 = arith.addf %252, %253 : vector<8x128xf32>
    %255 = vector.broadcast %87 : vector<1x128xf32> to vector<8x128xf32>
    %256 = arith.mulf %254, %255 : vector<8x128xf32>
    %257 = arith.negf %256 : vector<8x128xf32>
    %258 = math.exp %257 : vector<8x128xf32>
    %cst_107 = arith.constant 1.000000e+00 : f32
    %259 = vector.broadcast %cst_107 : f32 to vector<8x128xf32>
    %260 = arith.addf %259, %258 : vector<8x128xf32>
    %261 = arith.divf %259, %260 : vector<8x128xf32>
    %262 = vector.extract_strided_slice %261 {offsets = [0, 0], sizes = [8, 32], strides = [1, 1]} : vector<8x128xf32> to vector<8x32xf32>
    %263 = vector.extract_strided_slice %261 {offsets = [0, 32], sizes = [8, 32], strides = [1, 1]} : vector<8x128xf32> to vector<8x32xf32>
    %264 = vector.extract_strided_slice %261 {offsets = [0, 64], sizes = [8, 32], strides = [1, 1]} : vector<8x128xf32> to vector<8x32xf32>
    %cst_108 = arith.constant 2.000000e+00 : f32
    %265 = vector.broadcast %cst_108 : f32 to vector<8x32xf32>
    %266 = arith.mulf %265, %264 : vector<8x32xf32>
    %cst_109 = arith.constant 1.000000e+00 : f32
    %267 = vector.broadcast %cst_109 : f32 to vector<8x32xf32>
    %268 = arith.subf %266, %267 : vector<8x32xf32>
    %269 = vector.extract_strided_slice %261 {offsets = [0, 96], sizes = [8, 32], strides = [1, 1]} : vector<8x128xf32> to vector<8x32xf32>
    %270 = arith.mulf %263, %249 : vector<8x32xf32>
    %271 = arith.mulf %262, %268 : vector<8x32xf32>
    %272 = arith.addf %270, %271 : vector<8x32xf32>
    %273 = math.tanh %272 : vector<8x32xf32>
    %274 = arith.mulf %269, %273 : vector<8x32xf32>
    %275 = vector.broadcast %87 : vector<1x128xf32> to vector<8x128xf32>
    %276 = arith.mulf %78, %275 : vector<8x128xf32>
    %277 = arith.negf %276 : vector<8x128xf32>
    %278 = math.exp %277 : vector<8x128xf32>
    %cst_110 = arith.constant 1.000000e+00 : f32
    %279 = vector.broadcast %cst_110 : f32 to vector<8x128xf32>
    %280 = arith.addf %279, %278 : vector<8x128xf32>
    %281 = arith.divf %279, %280 : vector<8x128xf32>
    %282 = vector.extract_strided_slice %281 {offsets = [0, 0], sizes = [8, 32], strides = [1, 1]} : vector<8x128xf32> to vector<8x32xf32>
    %283 = vector.extract_strided_slice %281 {offsets = [0, 64], sizes = [8, 32], strides = [1, 1]} : vector<8x128xf32> to vector<8x32xf32>
    %cst_111 = arith.constant 2.000000e+00 : f32
    %284 = vector.broadcast %cst_111 : f32 to vector<8x32xf32>
    %285 = arith.mulf %284, %283 : vector<8x32xf32>
    %cst_112 = arith.constant 1.000000e+00 : f32
    %286 = vector.broadcast %cst_112 : f32 to vector<8x32xf32>
    %287 = arith.subf %285, %286 : vector<8x32xf32>
    %288 = vector.extract_strided_slice %281 {offsets = [0, 96], sizes = [8, 32], strides = [1, 1]} : vector<8x128xf32> to vector<8x32xf32>
    %289 = arith.mulf %282, %287 : vector<8x32xf32>
    %290 = math.tanh %289 : vector<8x32xf32>
    %291 = arith.mulf %288, %290 : vector<8x32xf32>
    %c0_113 = arith.constant 0 : index
    %c0_114 = arith.constant 0 : index
    %292 = vector.load %arg7[%c0_113, %c0_114] : memref<64x16xf32, #tpu.memory_space<vmem>>, vector<64x16xf32>
    %293 = vector.extract_strided_slice %292 {offsets = [0, 0], sizes = [32, 16], strides = [1, 1]} : vector<64x16xf32> to vector<32x16xf32>
    %cst_115 = arith.constant dense<0.000000e+00> : vector<8x16xf32>
    %294 = tpu.matmul %274, %293, %cst_115 {dimension_numbers = #tpu.dot_dimension_numbers<[1], [0], [0], [1], [0, 0, 1, 1], [], []>} : vector<8x32xf32>, vector<32x16xf32>, vector<8x16xf32> -> vector<8x16xf32>
    %295 = vector.extract_strided_slice %292 {offsets = [32, 0], sizes = [32, 16], strides = [1, 1]} : vector<64x16xf32> to vector<32x16xf32>
    %cst_116 = arith.constant dense<0.000000e+00> : vector<8x16xf32>
    %296 = tpu.matmul %291, %295, %cst_116 {dimension_numbers = #tpu.dot_dimension_numbers<[1], [0], [0], [1], [0, 0, 1, 1], [], []>} : vector<8x32xf32>, vector<32x16xf32>, vector<8x16xf32> -> vector<8x16xf32>
    %297 = arith.addf %294, %296 : vector<8x16xf32>
    %c0_117 = arith.constant 0 : index
    %c0_118 = arith.constant 0 : index
    %298 = vector.load %arg8[%c0_117, %c0_118] : memref<1x16xf32, #tpu.memory_space<vmem>>, vector<1x16xf32>
    %299 = vector.broadcast %298 : vector<1x16xf32> to vector<8x16xf32>
    %300 = arith.addf %297, %299 : vector<8x16xf32>
    %cst_119 = arith.constant dense<0xFF800000> : vector<8xf32>
    %301 = vector.multi_reduction <maximumf>, %300, %cst_119 [1] : vector<8x16xf32> to vector<8xf32>
    %302 = vector.shape_cast %301 : vector<8xf32> to vector<8x1xf32>
    %303 = vector.broadcast %302 : vector<8x1xf32> to vector<8x16xf32>
    %304 = arith.subf %300, %303 : vector<8x16xf32>
    %305 = math.exp %304 : vector<8x16xf32>
    %cst_120 = arith.constant dense<0.000000e+00> : vector<8xf32>
    %306 = vector.multi_reduction <add>, %305, %cst_120 [1] : vector<8x16xf32> to vector<8xf32>
    %307 = vector.shape_cast %306 : vector<8xf32> to vector<8x1xf32>
    %308 = math.log %307 : vector<8x1xf32>
    %309 = vector.broadcast %308 : vector<8x1xf32> to vector<8x16xf32>
    %310 = arith.subf %304, %309 : vector<8x16xf32>
    %311 = vector.extract_strided_slice %310 {offsets = [0, 0], sizes = [2, 16], strides = [1, 1]} : vector<8x16xf32> to vector<2x16xf32>
    %c0_121 = arith.constant 0 : index
    %c0_122 = arith.constant 0 : index
    %312 = vector.load %arg9[%c0_121, %c0_122] : memref<2x16xf32, #tpu.memory_space<vmem>>, vector<2x16xf32>
    tpu.vector_store %arg9[%c0_121, %c0_122], %311 {strides = array<i32>} : memref<2x16xf32, #tpu.memory_space<vmem>>, vector<2x16xf32>,
    return
  }
}

</mosaic_0001>

<llo_original>
// kernel: macnet_forward.1
$region0: #{macnet_forward.1}
  #allocation0 [shape = 'u32[]', space=smem, size = 0x4, offset = 0x4, fixed_abs, tag = 'smem constant byte address 0x4 - core index']
  #allocation1 [shape = 'u32[144,128]{1,0:T(1,128)}', space=vmem, size = 0x12000, scoped, tag = 'internal scratch']
  #allocation2 [shape = 'f32[64,32]{1,0:T(8,128)}', space=vmem, size = 0x8000, scoped, tag = 'scratch operand']
  %s0 = inlined_call_operand.vmem [shape: s32[2,8], index: 0, kind: input, shape index: {}]
  %s1 = inlined_call_operand.hbm [shape: f32[20,32], index: 1, kind: input, shape index: {}]
  %s2 = inlined_call_operand.vmem [shape: f32[32,128], index: 2, kind: input, shape index: {}]
  %s3 = inlined_call_operand.hbm [shape: f32[1,128], index: 3, kind: input, shape index: {}]
  %s4 = inlined_call_operand.vmem [shape: f32[32,128], index: 4, kind: input, shape index: {}]
  %s5 = inlined_call_operand.vmem [shape: f32[32,128], index: 5, kind: input, shape index: {}]
  %s6 = inlined_call_operand.hbm [shape: f32[1,128], index: 6, kind: input, shape index: {}]
  %s7 = inlined_call_operand.vmem [shape: f32[64,16], index: 7, kind: input, shape index: {}]
  %s8 = inlined_call_operand.hbm [shape: f32[1,16], index: 8, kind: input, shape index: {}]
  %s9 = inlined_call_operand.hbm [shape: f32[2,16], index: 9, kind: output, shape index: {}]
  %s10 = sld [smem:[#allocation0]]
  $region66: #{macnet_forward.1} parent=0
    _
  %s12 = ssub.s32 1, %s10
  %s13 = scalar_select 0, %s12, %s10
  $region1: #{macnet_forward.1} parent=0
    #allocation3 [shape = 'u8[1024]{0}', space=smem, size = 0x400, scoped, tag = 'input window, operand 0, single buffered']
    #allocation4 [shape = 's32[1]{0}', space=sflag, size = 0x4, scoped, tag = 'scoped memory for macnet_forward.1']
    #allocation5 [shape = 's32[1]{0}', space=sflag, size = 0x4, scoped, tag = 'scoped memory for macnet_forward.1']
    #allocation6 [shape = 's32[1]{0}', space=sflag, size = 0x4, scoped, tag = 'scoped memory for macnet_forward.1']
    #allocation7 [shape = 'u8[12288]{0}', space=vmem, size = 0x3000, scoped, tag = 'input window, operand 1, single buffered']
    #allocation8 [shape = 'u8[512]{0}', space=vmem, size = 0x400, scoped, tag = 'input window, operand 3, single buffered']
    #allocation9 [shape = 's32[1]{0}', space=sflag, size = 0x4, scoped, tag = 'scoped memory for macnet_forward.1']
    #allocation10 [shape = 'u8[512]{0}', space=vmem, size = 0x400, scoped, tag = 'input window, operand 6, single buffered']
    #allocation11 [shape = 'u8[512]{0}', space=vmem, size = 0x400, scoped, tag = 'input window, operand 8, single buffered']
    #allocation12 [shape = 's32[1]{0}', space=sflag, size = 0x4, scoped, tag = 'scoped memory for macnet_forward.1']
    #allocation13 [shape = 'u8[1024]{0}', space=vmem, size = 0x400, scoped, tag = 'output window, operand 0, single buffered']
    %14 = vsyncpa [#allocation6], 0
    %15 = vsyncpa [#allocation4], 0
    %16 = vsyncpa [#allocation9], 0
    %17 = vsyncpa [#allocation12], 0
    %18 = vsyncpa [#allocation5], 0
    // Predicated region
    $region2: #{macnet_forward.1} parent=1 // pred_check
      _
    $region3: #{macnet_forward.1} parent=1 // pred_check_branch
      %20 = sbr.rel (0) target = $region5
    $region4: #{macnet_forward.1} parent=1 // pred_region
      %s22 = ssub.s32 32, 32
      %23 = vsyncadd [#allocation6], %s22
      %s25 = sshll.u32 %s0, 4
      %s26 = int_to_ptr.vmem [resolvable:$true] %s25
      %28 = dma.vmem_to_smem %s26, 32, [#allocation3], [#allocation6]
    $region5: #{macnet_forward.1} parent=1 // pred_fallthru
      _
    // Predicated region
    $region6: #{macnet_forward.1} parent=1 // pred_check
      _
    $region7: #{macnet_forward.1} parent=1 // pred_check_branch
      %30 = sbr.rel (0) target = $region9
    $region8: #{macnet_forward.1} parent=1 // pred_region
      %s32 = ssub.s32 384, 384
      %33 = vsyncadd [#allocation4], %s32
      %s34 = sshll.u32 [#allocation7], 4
      %s35 = int_to_ptr.vmem [resolvable:$true] %s34
      %40 = dma.hbm_to_vmem [thread:$0]  %s1, 384, %s35, [#allocation4], 128, 128, 8
    $region9: #{macnet_forward.1} parent=1 // pred_fallthru
      _
    // Predicated region
    $region10: #{macnet_forward.1} parent=1 // pred_check
      _
    $region11: #{macnet_forward.1} parent=1 // pred_check_branch
      %42 = sbr.rel (0) target = $region13
    $region12: #{macnet_forward.1} parent=1 // pred_region
      _
    $region13: #{macnet_forward.1} parent=1 // pred_fallthru
      _
    // Predicated region
    $region14: #{macnet_forward.1} parent=1 // pred_check
      _
    $region15: #{macnet_forward.1} parent=1 // pred_check_branch
      %44 = sbr.rel (0) target = $region17
    $region16: #{macnet_forward.1} parent=1 // pred_region
      %s46 = ssub.s32 16, 16
      %47 = vsyncadd [#allocation9], %s46
      %s49 = sshll.u32 [#allocation8], 4
      %s50 = int_to_ptr.vmem [resolvable:$true] %s49
      %52 = dma.hbm_to_vmem [thread:$0]  %s3, 16, %s50, [#allocation9]
    $region17: #{macnet_forward.1} parent=1 // pred_fallthru
      _
    // Predicated region
    $region18: #{macnet_forward.1} parent=1 // pred_check
      _
    $region19: #{macnet_forward.1} parent=1 // pred_check_branch
      %54 = sbr.rel (0) target = $region21
    $region20: #{macnet_forward.1} parent=1 // pred_region
      _
    $region21: #{macnet_forward.1} parent=1 // pred_fallthru
      _
    // Predicated region
    $region22: #{macnet_forward.1} parent=1 // pred_check
      _
    $region23: #{macnet_forward.1} parent=1 // pred_check_branch
      %56 = sbr.rel (0) target = $region25
    $region24: #{macnet_forward.1} parent=1 // pred_region
      _
    $region25: #{macnet_forward.1} parent=1 // pred_fallthru
      _
    // Predicated region
    $region26: #{macnet_forward.1} parent=1 // pred_check
      _
    $region27: #{macnet_forward.1} parent=1 // pred_check_branch
      %58 = sbr.rel (0) target = $region29
    $region28: #{macnet_forward.1} parent=1 // pred_region
      %s60 = ssub.s32 16, 16
      %61 = vsyncadd [#allocation9], %s60
      %s63 = sshll.u32 [#allocation10], 4
      %s64 = int_to_ptr.vmem [resolvable:$true] %s63
      %66 = dma.hbm_to_vmem [thread:$0]  %s6, 16, %s64, [#allocation9]
    $region29: #{macnet_forward.1} parent=1 // pred_fallthru
      _
    // Predicated region
    $region30: #{macnet_forward.1} parent=1 // pred_check
      _
    $region31: #{macnet_forward.1} parent=1 // pred_check_branch
      %68 = sbr.rel (0) target = $region33
    $region32: #{macnet_forward.1} parent=1 // pred_region
      _
    $region33: #{macnet_forward.1} parent=1 // pred_fallthru
      _
    // Predicated region
    $region34: #{macnet_forward.1} parent=1 // pred_check
      _
    $region35: #{macnet_forward.1} parent=1 // pred_check_branch
      %70 = sbr.rel (0) target = $region37
    $region36: #{macnet_forward.1} parent=1 // pred_region
      %s72 = ssub.s32 16, 16
      %73 = vsyncadd [#allocation12], %s72
      %s75 = sshll.u32 [#allocation11], 4
      %s76 = int_to_ptr.vmem [resolvable:$true] %s75
      %78 = dma.hbm_to_vmem [thread:$0]  %s8, 16, %s76, [#allocation12]
    $region37: #{macnet_forward.1} parent=1 // pred_fallthru
      _
    // Predicated region
    $region38: #{macnet_forward.1} parent=1 // pred_check
      _
    $region39: #{macnet_forward.1} parent=1 // pred_check_branch
      %80 = sbr.rel (0) target = $region41
    $region40: #{macnet_forward.1} parent=1 // pred_region
      %81 = dma.done [#allocation6], 32
    $region41: #{macnet_forward.1} parent=1 // pred_fallthru
      _
    // Predicated region
    $region42: #{macnet_forward.1} parent=1 // pred_check
      _
    $region43: #{macnet_forward.1} parent=1 // pred_check_branch
      %83 = sbr.rel (0) target = $region45
    $region44: #{macnet_forward.1} parent=1 // pred_region
      %84 = dma.done [#allocation4], 384
    $region45: #{macnet_forward.1} parent=1 // pred_fallthru
      _
    // Predicated region
    $region46: #{macnet_forward.1} parent=1 // pred_check
      _
    $region47: #{macnet_forward.1} parent=1 // pred_check_branch
      %86 = sbr.rel (0) target = $region49
    $region48: #{macnet_forward.1} parent=1 // pred_region
      %87 = dma.done [#allocation9], 16
    $region49: #{macnet_forward.1} parent=1 // pred_fallthru
      _
    // Predicated region
    $region50: #{macnet_forward.1} parent=1 // pred_check
      _
    $region51: #{macnet_forward.1} parent=1 // pred_check_branch
      %89 = sbr.rel (0) target = $region53
    $region52: #{macnet_forward.1} parent=1 // pred_region
      %90 = dma.done [#allocation9], 16
    $region53: #{macnet_forward.1} parent=1 // pred_fallthru
      _
    // Predicated region
    $region54: #{macnet_forward.1} parent=1 // pred_check
      _
    $region55: #{macnet_forward.1} parent=1 // pred_check_branch
      %92 = sbr.rel (0) target = $region57
    $region56: #{macnet_forward.1} parent=1 // pred_region
      %93 = dma.done [#allocation12], 16
    $region57: #{macnet_forward.1} parent=1 // pred_fallthru
      _
    %94 = sfence
    %vm95 = vcmask 261120
    %96 = vst.msk [vmem:[#allocation2] sm:$0xff] %vm95, 0.0
    %97 = vst.msk [vmem:[#allocation2 + $0x8] sm:$0xff] %vm95, 0.0
    %98 = vst.msk [vmem:[#allocation2 + $0x10] sm:$0xff] %vm95, 0.0
    %99 = vst.msk [vmem:[#allocation2 + $0x18] sm:$0xff] %vm95, 0.0
    %100 = vst.msk [vmem:[#allocation2 + $0x20] sm:$0xff] %vm95, 0.0
    %101 = vst.msk [vmem:[#allocation2 + $0x28] sm:$0xff] %vm95, 0.0
    %102 = vst.msk [vmem:[#allocation2 + $0x30] sm:$0xff] %vm95, 0.0
    %103 = vst.msk [vmem:[#allocation2 + $0x38] sm:$0xff] %vm95, 0.0
    %s104 = sld [smem:[#allocation3]]
    %s105 = scalar_lea.vmem [#allocation7], %s104
    %v106 = vld [vmem:[%s105] sm:$0x1]
    %vm107 = vcmask 253952
    %108 = vst.msk [vmem:[#allocation2] sm:$0x1] %vm107, %v106
    %s109 = sld [smem:[#allocation3 + $0x80]]
    %s110 = scalar_lea.vmem [#allocation7], %s109
    %v111 = vld [vmem:[%s110] sm:$0x1]
    %112 = vst.msk [vmem:[#allocation2 + $0x1] sm:$0x1] %vm107, %v111
    %s113 = sld [smem:[#allocation3 + $0x1]]
    %s114 = scalar_lea.vmem [#allocation7], %s113
    %v115 = vld [vmem:[%s114] sm:$0x1]
    %116 = vst.msk [vmem:[#allocation2 + $0x8] sm:$0x1] %vm107, %v115
    %s117 = sld [smem:[#allocation3 + $0x81]]
    %s118 = scalar_lea.vmem [#allocation7], %s117
    %v119 = vld [vmem:[%s118] sm:$0x1]
    %120 = vst.msk [vmem:[#allocation2 + $0x9] sm:$0x1] %vm107, %v119
    %s121 = sld [smem:[#allocation3 + $0x2]]
    %s122 = scalar_lea.vmem [#allocation7], %s121
    %v123 = vld [vmem:[%s122] sm:$0x1]
    %124 = vst.msk [vmem:[#allocation2 + $0x10] sm:$0x1] %vm107, %v123
    %s125 = sld [smem:[#allocation3 + $0x82]]
    %s126 = scalar_lea.vmem [#allocation7], %s125
    %v127 = vld [vmem:[%s126] sm:$0x1]
    %128 = vst.msk [vmem:[#allocation2 + $0x11] sm:$0x1] %vm107, %v127
    %s129 = sld [smem:[#allocation3 + $0x3]]
    %s130 = scalar_lea.vmem [#allocation7], %s129
    %v131 = vld [vmem:[%s130] sm:$0x1]
    %132 = vst.msk [vmem:[#allocation2 + $0x18] sm:$0x1] %vm107, %v131
    %s133 = sld [smem:[#allocation3 + $0x83]]
    %s134 = scalar_lea.vmem [#allocation7], %s133
    %v135 = vld [vmem:[%s134] sm:$0x1]
    %136 = vst.msk [vmem:[#allocation2 + $0x19] sm:$0x1] %vm107, %v135
    %s137 = sld [smem:[#allocation3 + $0x4]]
    %s138 = scalar_lea.vmem [#allocation7], %s137
    %v139 = vld [vmem:[%s138] sm:$0x1]
    %140 = vst.msk [vmem:[#allocation2 + $0x20] sm:$0x1] %vm107, %v139
    %s141 = sld [smem:[#allocation3 + $0x84]]
    %s142 = scalar_lea.vmem [#allocation7], %s141
    %v143 = vld [vmem:[%s142] sm:$0x1]
    %144 = vst.msk [vmem:[#allocation2 + $0x21] sm:$0x1] %vm107, %v143
    %s145 = sld [smem:[#allocation3 + $0x5]]
    %s146 = scalar_lea.vmem [#allocation7], %s145
    %v147 = vld [vmem:[%s146] sm:$0x1]
    %148 = vst.msk [vmem:[#allocation2 + $0x28] sm:$0x1] %vm107, %v147
    %s149 = sld [smem:[#allocation3 + $0x85]]
    %s150 = scalar_lea.vmem [#allocation7], %s149
    %v151 = vld [vmem:[%s150] sm:$0x1]
    %152 = vst.msk [vmem:[#allocation2 + $0x29] sm:$0x1] %vm107, %v151
    %s153 = sld [smem:[#allocation3 + $0x6]]
    %s154 = scalar_lea.vmem [#allocation7], %s153
    %v155 = vld [vmem:[%s154] sm:$0x1]
    %156 = vst.msk [vmem:[#allocation2 + $0x30] sm:$0x1] %vm107, %v155
    %s157 = sld [smem:[#allocation3 + $0x86]]
    %s158 = scalar_lea.vmem [#allocation7], %s157
    %v159 = vld [vmem:[%s158] sm:$0x1]
    %160 = vst.msk [vmem:[#allocation2 + $0x31] sm:$0x1] %vm107, %v159
    %s161 = sld [smem:[#allocation3 + $0x7]]
    %s162 = scalar_lea.vmem [#allocation7], %s161
    %v163 = vld [vmem:[%s162] sm:$0x1]
    %164 = vst.msk [vmem:[#allocation2 + $0x38] sm:$0x1] %vm107, %v163
    %s165 = sld [smem:[#allocation3 + $0x87]]
    %s166 = scalar_lea.vmem [#allocation7], %s165
    %v167 = vld [vmem:[%s166] sm:$0x1]
    %168 = vst.msk [vmem:[#allocation2 + $0x39] sm:$0x1] %vm107, %v167
    %v169 = vld [vmem:[#allocation2] sm:$0xff]
    %v170 = vld [vmem:[#allocation2 + $0x8] sm:$0xff]
    %v171 = vld [vmem:[#allocation2 + $0x10] sm:$0xff]
    %v172 = vld [vmem:[#allocation2 + $0x18] sm:$0xff]
    %v173 = vld [vmem:[#allocation2 + $0x20] sm:$0xff]
    %v174 = vld [vmem:[#allocation2 + $0x28] sm:$0xff]
    %v175 = vld [vmem:[#allocation2 + $0x30] sm:$0xff]
    %v176 = vld [vmem:[#allocation2 + $0x38] sm:$0xff]
    %v177 = vtanh.pop %v169
    %v178 = vtanh.pop %v170
    %v179 = vtanh.pop %v171
    %v180 = vtanh.pop %v172
    %v181 = vtanh.pop %v173
    %v182 = vtanh.pop %v174
    %v183 = vtanh.pop %v175
    %v184 = vtanh.pop %v176
    %v185 = vld [vmem:[%s2] sm:$0xff]
    %v186 = vld [vmem:[%s2 + $0x8] sm:$0xff]
    %v187 = vld [vmem:[%s2 + $0x10] sm:$0xff]
    %v188 = vld [vmem:[%s2 + $0x18] sm:$0xff]
    %v189 = vld [vmem:[#allocation8] sm:$0x1]
    %v191 = vlaneseq
    %v192 = vshrl.u32 %v191, 7
    %v193 = vsub.s32 0, %v192
    %v194 = vrot.slane %v189, %v193
    %v197 = vsel %vm95, %v177, 0
    %v200 = vsel %vm95, %v178, 0
    %v203 = vsel %vm95, %v179, 0
    %v206 = vsel %vm95, %v180, 0
    %v209 = vsel %vm95, %v181, 0
    %v212 = vsel %vm95, %v182, 0
    %v215 = vsel %vm95, %v183, 0
    %v218 = vsel %vm95, %v184, 0
    %220 = vmatprep.subr.mxu0 0.0
    %221 = vmatpush1.msra.mxu0 %v185
    %222 = vmatprep.subr.mxu0 0.0
    %223 = vmatpush1.msra.mxu0 %v186
    %224 = vmatprep.subr.mxu0 0.0
    %225 = vmatpush1.msra.mxu0 %v187
    %226 = vmatprep.subr.mxu0 0.0
    %227 = vmatpush1.msra.mxu0 %v188
    %228 = vmatprep.subr.mxu0 0.0
    %229 = vmatpush1.msra.mxu0 0.0
    %230 = vmatprep.subr.mxu0 0.0
    %231 = vmatpush1.msra.mxu0 0.0
    %232 = vmatprep.subr.mxu0 0.0
    %233 = vmatpush1.msra.mxu0 0.0
    %234 = vmatprep.subr.mxu0 0.0
    %235 = vmatpush1.msra.mxu0 0.0
    %236 = vmatprep.subr.mxu0 0.0
    %237 = vmatpush1.msra.mxu0 0.0
    %238 = vmatprep.subr.mxu0 0.0
    %239 = vmatpush1.msra.mxu0 0.0
    %240 = vmatprep.subr.mxu0 0.0
    %241 = vmatpush1.msra.mxu0 0.0
    %242 = vmatprep.subr.mxu0 0.0
    %243 = vmatpush1.msra.mxu0 0.0
    %244 = vmatprep.subr.mxu0 0.0
    %245 = vmatpush1.msra.mxu0 0.0
    %246 = vmatprep.subr.mxu0 0.0
    %247 = vmatpush1.msra.mxu0 0.0
    %248 = vmatprep.subr.mxu0 0.0
    %249 = vmatpush1.msra.mxu0 0.0
    %250 = vmatprep.subr.mxu0 0.0
    %251 = vmatpush1.msra.mxu0 0.0
    %252 = vmatprep.subr.mxu0 0.0
    %253 = vmatpush1.msra.mxu0 0.0
    %254 = vmatprep.subr.mxu0 0.0
    %255 = vmatpush1.msra.mxu0 0.0
    %256 = vmatprep.subr.mxu0 0.0
    %257 = vmatpush1.msra.mxu0 0.0
    %258 = vmatprep.subr.mxu0 0.0
    %259 = vmatpush1.msra.mxu0 0.0
    %260 = vmatprep.subr.mxu0 0.0
    %261 = vmatpush1.msra.mxu0 0.0
    %262 = vmatprep.subr.mxu0 0.0
    %263 = vmatpush1.msra.mxu0 0.0
    %264 = vmatprep.subr.mxu0 0.0
    %265 = vmatpush1.msra.mxu0 0.0
    %266 = vmatprep.subr.mxu0 0.0
    %267 = vmatpush1.msra.mxu0 0.0
    %268 = vmatprep.subr.mxu0 0.0
    %269 = vmatpush1.msra.mxu0 0.0
    %270 = vmatprep.subr.mxu0 0.0
    %271 = vmatpush1.msra.mxu0 0.0
    %272 = vmatprep.subr.mxu0 0.0
    %273 = vmatpush1.msra.mxu0 0.0
    %274 = vmatprep.subr.mxu0 0.0
    %275 = vmatpush1.msra.mxu0 0.0
    %276 = vmatprep.subr.mxu0 0.0
    %277 = vmatpush1.msra.mxu0 0.0
    %278 = vmatprep.subr.mxu0 0.0
    %279 = vmatpush1.msra.mxu0 0.0
    %280 = vmatprep.subr.mxu0 0.0
    %281 = vmatpush1.msra.mxu0 0.0
    %282 = vmatprep.subr.mxu0 0.0
    %283 = vmatpush1.msra.mxu0 0.0
    %284 = vmatprep.mubr.f32.mxu0 0.0
    %285 = vmatmul.mubr.f32.gmra.mrb[0].mxu0 %v197
    %v286 = vpop.f32.mrb[0].mxu0
    %v287 = vadd.f32 %v194, %v286
    %v288 = vpop.f32.mrb[0].mxu0
    %289 = vmatprep.mubr.f32.mxu0 0.0
    %290 = vmatmul.mubr.f32.gmra.mrb[0].mxu0 %v200
    %v291 = vpop.f32.mrb[0].mxu0
    %v292 = vadd.f32 %v194, %v291
    %v293 = vpop.f32.mrb[0].mxu0
    %294 = vmatprep.mubr.f32.mxu0 0.0
    %295 = vmatmul.mubr.f32.gmra.mrb[0].mxu0 %v203
    %v296 = vpop.f32.mrb[0].mxu0
    %v297 = vadd.f32 %v194, %v296
    %v298 = vpop.f32.mrb[0].mxu0
    %299 = vmatprep.mubr.f32.mxu0 0.0
    %300 = vmatmul.mubr.f32.gmra.mrb[0].mxu0 %v206
    %v301 = vpop.f32.mrb[0].mxu0
    %v302 = vadd.f32 %v194, %v301
    %v303 = vpop.f32.mrb[0].mxu0
    %304 = vmatprep.mubr.f32.mxu0 0.0
    %305 = vmatmul.mubr.f32.gmra.mrb[0].mxu0 %v209
    %v306 = vpop.f32.mrb[0].mxu0
    %v307 = vadd.f32 %v194, %v306
    %v308 = vpop.f32.mrb[0].mxu0
    %309 = vmatprep.mubr.f32.mxu0 0.0
    %310 = vmatmul.mubr.f32.gmra.mrb[0].mxu0 %v212
    %v311 = vpop.f32.mrb[0].mxu0
    %v312 = vadd.f32 %v194, %v311
    %v313 = vpop.f32.mrb[0].mxu0
    %314 = vmatprep.mubr.f32.mxu0 0.0
    %315 = vmatmul.mubr.f32.gmra.mrb[0].mxu0 %v215
    %v316 = vpop.f32.mrb[0].mxu0
    %v317 = vadd.f32 %v194, %v316
    %v318 = vpop.f32.mrb[0].mxu0
    %319 = vmatprep.mubr.f32.mxu0 0.0
    %320 = vmatmul.mubr.f32.gmra.mrb[0].mxu0 %v218
    %v321 = vpop.f32.mrb[0].mxu0
    %v322 = vadd.f32 %v194, %v321
    %v323 = vpop.f32.mrb[0].mxu0
    %324 = vdwg.mxu0
    %v325 = vld [vmem:[%s5] sm:$0xff]
    %v326 = vld [vmem:[%s5 + $0x8] sm:$0xff]
    %v327 = vld [vmem:[%s5 + $0x10] sm:$0xff]
    %v328 = vld [vmem:[%s5 + $0x18] sm:$0xff]
    %v329 = vld [vmem:[#allocation10] sm:$0x1]
    %v331 = vlaneseq
    %v332 = vshrl.u32 %v331, 7
    %v333 = vsub.s32 0, %v332
    %v334 = vrot.slane %v329, %v333
    %336 = vmatprep.subr.mxu0 0.0
    %337 = vmatpush1.msra.mxu0 %v325
    %338 = vmatprep.subr.mxu0 0.0
    %339 = vmatpush1.msra.mxu0 %v326
    %340 = vmatprep.subr.mxu0 0.0
    %341 = vmatpush1.msra.mxu0 %v327
    %342 = vmatprep.subr.mxu0 0.0
    %343 = vmatpush1.msra.mxu0 %v328
    %344 = vmatprep.subr.mxu0 0.0
    %345 = vmatpush1.msra.mxu0 0.0
    %346 = vmatprep.subr.mxu0 0.0
    %347 = vmatpush1.msra.mxu0 0.0
    %348 = vmatprep.subr.mxu0 0.0
    %349 = vmatpush1.msra.mxu0 0.0
    %350 = vmatprep.subr.mxu0 0.0
    %351 = vmatpush1.msra.mxu0 0.0
    %352 = vmatprep.subr.mxu0 0.0
    %353 = vmatpush1.msra.mxu0 0.0
    %354 = vmatprep.subr.mxu0 0.0
    %355 = vmatpush1.msra.mxu0 0.0
    %356 = vmatprep.subr.mxu0 0.0
    %357 = vmatpush1.msra.mxu0 0.0
    %358 = vmatprep.subr.mxu0 0.0
    %359 = vmatpush1.msra.mxu0 0.0
    %360 = vmatprep.subr.mxu0 0.0
    %361 = vmatpush1.msra.mxu0 0.0
    %362 = vmatprep.subr.mxu0 0.0
    %363 = vmatpush1.msra.mxu0 0.0
    %364 = vmatprep.subr.mxu0 0.0
    %365 = vmatpush1.msra.mxu0 0.0
    %366 = vmatprep.subr.mxu0 0.0
    %367 = vmatpush1.msra.mxu0 0.0
    %368 = vmatprep.subr.mxu0 0.0
    %369 = vmatpush1.msra.mxu0 0.0
    %370 = vmatprep.subr.mxu0 0.0
    %371 = vmatpush1.msra.mxu0 0.0
    %372 = vmatprep.subr.mxu0 0.0
    %373 = vmatpush1.msra.mxu0 0.0
    %374 = vmatprep.subr.mxu0 0.0
    %375 = vmatpush1.msra.mxu0 0.0
    %376 = vmatprep.subr.mxu0 0.0
    %377 = vmatpush1.msra.mxu0 0.0
    %378 = vmatprep.subr.mxu0 0.0
    %379 = vmatpush1.msra.mxu0 0.0
    %380 = vmatprep.subr.mxu0 0.0
    %381 = vmatpush1.msra.mxu0 0.0
    %382 = vmatprep.subr.mxu0 0.0
    %383 = vmatpush1.msra.mxu0 0.0
    %384 = vmatprep.subr.mxu0 0.0
    %385 = vmatpush1.msra.mxu0 0.0
    %386 = vmatprep.subr.mxu0 0.0
    %387 = vmatpush1.msra.mxu0 0.0
    %388 = vmatprep.subr.mxu0 0.0
    %389 = vmatpush1.msra.mxu0 0.0
    %390 = vmatprep.subr.mxu0 0.0
    %391 = vmatpush1.msra.mxu0 0.0
    %392 = vmatprep.subr.mxu0 0.0
    %393 = vmatpush1.msra.mxu0 0.0
    %394 = vmatprep.subr.mxu0 0.0
    %395 = vmatpush1.msra.mxu0 0.0
    %396 = vmatprep.subr.mxu0 0.0
    %397 = vmatpush1.msra.mxu0 0.0
    %398 = vmatprep.subr.mxu0 0.0
    %399 = vmatpush1.msra.mxu0 0.0
    %400 = vmatprep.mubr.f32.mxu0 0.0
    %401 = vmatmul.mubr.f32.gmra.mrb[0].mxu0 %v218
    %v402 = vpop.f32.mrb[0].mxu0
    %v403 = vadd.f32 %v334, %v402
    %v404 = vpop.f32.mrb[0].mxu0
    %405 = vdwg.mxu0
    %v406 = vlaneseq
    %v407 = vand.u32 %v406, 127
    %vm408 = vcmp.ge.s32.totalorder %v407, 64
    %vm409 = vcmp.lt.s32.totalorder %v407, 96
    %vm410 = vmand %vm408, %vm409
    %v411 = vsel %vm410, 2.0, 1.0
    %v412 = vld [vmem:[%s4] sm:$0xff]
    %v413 = vld [vmem:[%s4 + $0x8] sm:$0xff]
    %v414 = vld [vmem:[%s4 + $0x10] sm:$0xff]
    %v415 = vld [vmem:[%s4 + $0x18] sm:$0xff]
    %v417 = vsel %vm95, 0.0, 0
    %419 = vmatprep.subr.mxu0 0.0
    %420 = vmatpush1.msra.mxu0 %v412
    %421 = vmatprep.subr.mxu0 0.0
    %422 = vmatpush1.msra.mxu0 %v413
    %423 = vmatprep.subr.mxu0 0.0
    %424 = vmatpush1.msra.mxu0 %v414
    %425 = vmatprep.subr.mxu0 0.0
    %426 = vmatpush1.msra.mxu0 %v415
    %427 = vmatprep.subr.mxu0 0.0
    %428 = vmatpush1.msra.mxu0 0.0
    %429 = vmatprep.subr.mxu0 0.0
    %430 = vmatpush1.msra.mxu0 0.0
    %431 = vmatprep.subr.mxu0 0.0
    %432 = vmatpush1.msra.mxu0 0.0
    %433 = vmatprep.subr.mxu0 0.0
    %434 = vmatpush1.msra.mxu0 0.0
    %435 = vmatprep.subr.mxu0 0.0
    %436 = vmatpush1.msra.mxu0 0.0
    %437 = vmatprep.subr.mxu0 0.0
    %438 = vmatpush1.msra.mxu0 0.0
    %439 = vmatprep.subr.mxu0 0.0
    %440 = vmatpush1.msra.mxu0 0.0
    %441 = vmatprep.subr.mxu0 0.0
    %442 = vmatpush1.msra.mxu0 0.0
    %443 = vmatprep.subr.mxu0 0.0
    %444 = vmatpush1.msra.mxu0 0.0
    %445 = vmatprep.subr.mxu0 0.0
    %446 = vmatpush1.msra.mxu0 0.0
    %447 = vmatprep.subr.mxu0 0.0
    %448 = vmatpush1.msra.mxu0 0.0
    %449 = vmatprep.subr.mxu0 0.0
    %450 = vmatpush1.msra.mxu0 0.0
    %451 = vmatprep.subr.mxu0 0.0
    %452 = vmatpush1.msra.mxu0 0.0
    %453 = vmatprep.subr.mxu0 0.0
    %454 = vmatpush1.msra.mxu0 0.0
    %455 = vmatprep.subr.mxu0 0.0
    %456 = vmatpush1.msra.mxu0 0.0
    %457 = vmatprep.subr.mxu0 0.0
    %458 = vmatpush1.msra.mxu0 0.0
    %459 = vmatprep.subr.mxu0 0.0
    %460 = vmatpush1.msra.mxu0 0.0
    %461 = vmatprep.subr.mxu0 0.0
    %462 = vmatpush1.msra.mxu0 0.0
    %463 = vmatprep.subr.mxu0 0.0
    %464 = vmatpush1.msra.mxu0 0.0
    %465 = vmatprep.subr.mxu0 0.0
    %466 = vmatpush1.msra.mxu0 0.0
    %467 = vmatprep.subr.mxu0 0.0
    %468 = vmatpush1.msra.mxu0 0.0
    %469 = vmatprep.subr.mxu0 0.0
    %470 = vmatpush1.msra.mxu0 0.0
    %471 = vmatprep.subr.mxu0 0.0
    %472 = vmatpush1.msra.mxu0 0.0
    %473 = vmatprep.subr.mxu0 0.0
    %474 = vmatpush1.msra.mxu0 0.0
    %475 = vmatprep.subr.mxu0 0.0
    %476 = vmatpush1.msra.mxu0 0.0
    %477 = vmatprep.subr.mxu0 0.0
    %478 = vmatpush1.msra.mxu0 0.0
    %479 = vmatprep.subr.mxu0 0.0
    %480 = vmatpush1.msra.mxu0 0.0
    %481 = vmatprep.subr.mxu0 0.0
    %482 = vmatpush1.msra.mxu0 0.0
    %483 = vmatprep.mubr.f32.mxu0 0.0
    %484 = vmatmul.mubr.f32.gmra.mrb[0].mxu0 %v417
    %v485 = vpop.f32.mrb[0].mxu0
    %v486 = vadd.f32 0.0, %v485
    %v487 = vpop.f32.mrb[0].mxu0
    %488 = vdwg.mxu0
    %v489 = vadd.f32 %v287, %v486
    %v490 = vmul.f32 %v489, %v411
    %v491 = vxor.u32 %v490, 2147483648
    %v492 = vmul.f32 %v491, 1.442695
    %v493 = vpow.pop %v492
    %v494 = vadd.f32 %v493, 1.0
    %v495 = vrcp.pop %v494
    %v496 = vmul.f32 1.0, %v495
    %v497 = vmul.f32 %v496, 2.0
    %v498 = vsub.f32 %v497, 1.0
    %v499 = vmul.f32 %v496, 0.0
    %501 = vrot.lane.b32.xlu0 %v498, 64
    %v502 = vpop.permute.xlu0 %501
    %v504 = vmul.f32 %v496, %v502
    %506 = vrot.lane.b32.xlu0 %v504, 32
    %v507 = vpop.permute.xlu0 %506
    %v509 = vadd.f32 %v499, %v507
    %v510 = vtanh.pop %v509
    %512 = vrot.lane.b32.xlu0 %v510, 64
    %v513 = vpop.permute.xlu0 %512
    %v515 = vmul.f32 %v496, %v513
    %517 = vrot.lane.b32.xlu0 %v515, 32
    %v518 = vpop.permute.xlu0 %517
    %v519 = vsel %vm95, %v518, 0
    %521 = vmatprep.subr.mxu0 0.0
    %522 = vmatpush1.msra.mxu0 %v412
    %523 = vmatprep.subr.mxu0 0.0
    %524 = vmatpush1.msra.mxu0 %v413
    %525 = vmatprep.subr.mxu0 0.0
    %526 = vmatpush1.msra.mxu0 %v414
    %527 = vmatprep.subr.mxu0 0.0
    %528 = vmatpush1.msra.mxu0 %v415
    %529 = vmatprep.subr.mxu0 0.0
    %530 = vmatpush1.msra.mxu0 0.0
    %531 = vmatprep.subr.mxu0 0.0
    %532 = vmatpush1.msra.mxu0 0.0
    %533 = vmatprep.subr.mxu0 0.0
    %534 = vmatpush1.msra.mxu0 0.0
    %535 = vmatprep.subr.mxu0 0.0
    %536 = vmatpush1.msra.mxu0 0.0
    %537 = vmatprep.subr.mxu0 0.0
    %538 = vmatpush1.msra.mxu0 0.0
    %539 = vmatprep.subr.mxu0 0.0
    %540 = vmatpush1.msra.mxu0 0.0
    %541 = vmatprep.subr.mxu0 0.0
    %542 = vmatpush1.msra.mxu0 0.0
    %543 = vmatprep.subr.mxu0 0.0
    %544 = vmatpush1.msra.mxu0 0.0
    %545 = vmatprep.subr.mxu0 0.0
    %546 = vmatpush1.msra.mxu0 0.0
    %547 = vmatprep.subr.mxu0 0.0
    %548 = vmatpush1.msra.mxu0 0.0
    %549 = vmatprep.subr.mxu0 0.0
    %550 = vmatpush1.msra.mxu0 0.0
    %551 = vmatprep.subr.mxu0 0.0
    %552 = vmatpush1.msra.mxu0 0.0
    %553 = vmatprep.subr.mxu0 0.0
    %554 = vmatpush1.msra.mxu0 0.0
    %555 = vmatprep.subr.mxu0 0.0
    %556 = vmatpush1.msra.mxu0 0.0
    %557 = vmatprep.subr.mxu0 0.0
    %558 = vmatpush1.msra.mxu0 0.0
    %559 = vmatprep.subr.mxu0 0.0
    %560 = vmatpush1.msra.mxu0 0.0
    %561 = vmatprep.subr.mxu0 0.0
    %562 = vmatpush1.msra.mxu0 0.0
    %563 = vmatprep.subr.mxu0 0.0
    %564 = vmatpush1.msra.mxu0 0.0
    %565 = vmatprep.subr.mxu0 0.0
    %566 = vmatpush1.msra.mxu0 0.0
    %567 = vmatprep.subr.mxu0 0.0
    %568 = vmatpush1.msra.mxu0 0.0
    %569 = vmatprep.subr.mxu0 0.0
    %570 = vmatpush1.msra.mxu0 0.0
    %571 = vmatprep.subr.mxu0 0.0
    %572 = vmatpush1.msra.mxu0 0.0
    %573 = vmatprep.subr.mxu0 0.0
    %574 = vmatpush1.msra.mxu0 0.0
    %575 = vmatprep.subr.mxu0 0.0
    %576 = vmatpush1.msra.mxu0 0.0
    %577 = vmatprep.subr.mxu0 0.0
    %578 = vmatpush1.msra.mxu0 0.0
    %579 = vmatprep.subr.mxu0 0.0
    %580 = vmatpush1.msra.mxu0 0.0
    %581 = vmatprep.subr.mxu0 0.0
    %582 = vmatpush1.msra.mxu0 0.0
    %583 = vmatprep.subr.mxu0 0.0
    %584 = vmatpush1.msra.mxu0 0.0
    %585 = vmatprep.mubr.f32.mxu0 0.0
    %586 = vmatmul.mubr.f32.gmra.mrb[0].mxu0 %v519
    %v587 = vpop.f32.mrb[0].mxu0
    %v588 = vadd.f32 0.0, %v587
    %v589 = vpop.f32.mrb[0].mxu0
    %590 = vdwg.mxu0
    %v591 = vadd.f32 %v292, %v588
    %v592 = vmul.f32 %v591, %v411
    %v593 = vxor.u32 %v592, 2147483648
    %v594 = vmul.f32 %v593, 1.442695
    %v595 = vpow.pop %v594
    %v596 = vadd.f32 %v595, 1.0
    %v597 = vrcp.pop %v596
    %v598 = vmul.f32 1.0, %v597
    %v599 = vmul.f32 %v598, 2.0
    %v600 = vsub.f32 %v599, 1.0
    %v601 = vmul.f32 %v598, %v509
    %603 = vrot.lane.b32.xlu0 %v600, 64
    %v604 = vpop.permute.xlu0 %603
    %v606 = vmul.f32 %v598, %v604
    %608 = vrot.lane.b32.xlu0 %v606, 32
    %v609 = vpop.permute.xlu0 %608
    %v611 = vadd.f32 %v601, %v609
    %v612 = vtanh.pop %v611
    %614 = vrot.lane.b32.xlu0 %v612, 64
    %v615 = vpop.permute.xlu0 %614
    %v617 = vmul.f32 %v598, %v615
    %619 = vrot.lane.b32.xlu0 %v617, 32
    %v620 = vpop.permute.xlu0 %619
    %v621 = vsel %vm95, %v620, 0
    %623 = vmatprep.subr.mxu0 0.0
    %624 = vmatpush1.msra.mxu0 %v412
    %625 = vmatprep.subr.mxu0 0.0
    %626 = vmatpush1.msra.mxu0 %v413
    %627 = vmatprep.subr.mxu0 0.0
    %628 = vmatpush1.msra.mxu0 %v414
    %629 = vmatprep.subr.mxu0 0.0
    %630 = vmatpush1.msra.mxu0 %v415
    %631 = vmatprep.subr.mxu0 0.0
    %632 = vmatpush1.msra.mxu0 0.0
    %633 = vmatprep.subr.mxu0 0.0
    %634 = vmatpush1.msra.mxu0 0.0
    %635 = vmatprep.subr.mxu0 0.0
    %636 = vmatpush1.msra.mxu0 0.0
    %637 = vmatprep.subr.mxu0 0.0
    %638 = vmatpush1.msra.mxu0 0.0
    %639 = vmatprep.subr.mxu0 0.0
    %640 = vmatpush1.msra.mxu0 0.0
    %641 = vmatprep.subr.mxu0 0.0
    %642 = vmatpush1.msra.mxu0 0.0
    %643 = vmatprep.subr.mxu0 0.0
    %644 = vmatpush1.msra.mxu0 0.0
    %645 = vmatprep.subr.mxu0 0.0
    %646 = vmatpush1.msra.mxu0 0.0
    %647 = vmatprep.subr.mxu0 0.0
    %648 = vmatpush1.msra.mxu0 0.0
    %649 = vmatprep.subr.mxu0 0.0
    %650 = vmatpush1.msra.mxu0 0.0
    %651 = vmatprep.subr.mxu0 0.0
    %652 = vmatpush1.msra.mxu0 0.0
    %653 = vmatprep.subr.mxu0 0.0
    %654 = vmatpush1.msra.mxu0 0.0
    %655 = vmatprep.subr.mxu0 0.0
    %656 = vmatpush1.msra.mxu0 0.0
    %657 = vmatprep.subr.mxu0 0.0
    %658 = vmatpush1.msra.mxu0 0.0
    %659 = vmatprep.subr.mxu0 0.0
    %660 = vmatpush1.msra.mxu0 0.0
    %661 = vmatprep.subr.mxu0 0.0
    %662 = vmatpush1.msra.mxu0 0.0
    %663 = vmatprep.subr.mxu0 0.0
    %664 = vmatpush1.msra.mxu0 0.0
    %665 = vmatprep.subr.mxu0 0.0
    %666 = vmatpush1.msra.mxu0 0.0
    %667 = vmatprep.subr.mxu0 0.0
    %668 = vmatpush1.msra.mxu0 0.0
    %669 = vmatprep.subr.mxu0 0.0
    %670 = vmatpush1.msra.mxu0 0.0
    %671 = vmatprep.subr.mxu0 0.0
    %672 = vmatpush1.msra.mxu0 0.0
    %673 = vmatprep.subr.mxu0 0.0
    %674 = vmatpush1.msra.mxu0 0.0
    %675 = vmatprep.subr.mxu0 0.0
    %676 = vmatpush1.msra.mxu0 0.0
    %677 = vmatprep.subr.mxu0 0.0
    %678 = vmatpush1.msra.mxu0 0.0
    %679 = vmatprep.subr.mxu0 0.0
    %680 = vmatpush1.msra.mxu0 0.0
    %681 = vmatprep.subr.mxu0 0.0
    %682 = vmatpush1.msra.mxu0 0.0
    %683 = vmatprep.subr.mxu0 0.0
    %684 = vmatpush1.msra.mxu0 0.0
    %685 = vmatprep.subr.mxu0 0.0
    %686 = vmatpush1.msra.mxu0 0.0
    %687 = vmatprep.mubr.f32.mxu0 0.0
    %688 = vmatmul.mubr.f32.gmra.mrb[0].mxu0 %v621
    %v689 = vpop.f32.mrb[0].mxu0
    %v690 = vadd.f32 0.0, %v689
    %v691 = vpop.f32.mrb[0].mxu0
    %692 = vdwg.mxu0
    %v693 = vadd.f32 %v297, %v690
    %v694 = vmul.f32 %v693, %v411
    %v695 = vxor.u32 %v694, 2147483648
    %v696 = vmul.f32 %v695, 1.442695
    %v697 = vpow.pop %v696
    %v698 = vadd.f32 %v697, 1.0
    %v699 = vrcp.pop %v698
    %v700 = vmul.f32 1.0, %v699
    %v701 = vmul.f32 %v700, 2.0
    %v702 = vsub.f32 %v701, 1.0
    %v703 = vmul.f32 %v700, %v611
    %705 = vrot.lane.b32.xlu0 %v702, 64
    %v706 = vpop.permute.xlu0 %705
    %v708 = vmul.f32 %v700, %v706
    %710 = vrot.lane.b32.xlu0 %v708, 32
    %v711 = vpop.permute.xlu0 %710
    %v713 = vadd.f32 %v703, %v711
    %v714 = vtanh.pop %v713
    %716 = vrot.lane.b32.xlu0 %v714, 64
    %v717 = vpop.permute.xlu0 %716
    %v719 = vmul.f32 %v700, %v717
    %721 = vrot.lane.b32.xlu0 %v719, 32
    %v722 = vpop.permute.xlu0 %721
    %v723 = vsel %vm95, %v722, 0
    %725 = vmatprep.subr.mxu0 0.0
    %726 = vmatpush1.msra.mxu0 %v412
    %727 = vmatprep.subr.mxu0 0.0
    %728 = vmatpush1.msra.mxu0 %v413
    %729 = vmatprep.subr.mxu0 0.0
    %730 = vmatpush1.msra.mxu0 %v414
    %731 = vmatprep.subr.mxu0 0.0
    %732 = vmatpush1.msra.mxu0 %v415
    %733 = vmatprep.subr.mxu0 0.0
    %734 = vmatpush1.msra.mxu0 0.0
    %735 = vmatprep.subr.mxu0 0.0
    %736 = vmatpush1.msra.mxu0 0.0
    %737 = vmatprep.subr.mxu0 0.0
    %738 = vmatpush1.msra.mxu0 0.0
    %739 = vmatprep.subr.mxu0 0.0
    %740 = vmatpush1.msra.mxu0 0.0
    %741 = vmatprep.subr.mxu0 0.0
    %742 = vmatpush1.msra.mxu0 0.0
    %743 = vmatprep.subr.mxu0 0.0
    %744 = vmatpush1.msra.mxu0 0.0
    %745 = vmatprep.subr.mxu0 0.0
    %746 = vmatpush1.msra.mxu0 0.0
    %747 = vmatprep.subr.mxu0 0.0
    %748 = vmatpush1.msra.mxu0 0.0
    %749 = vmatprep.subr.mxu0 0.0
    %750 = vmatpush1.msra.mxu0 0.0
    %751 = vmatprep.subr.mxu0 0.0
    %752 = vmatpush1.msra.mxu0 0.0
    %753 = vmatprep.subr.mxu0 0.0
    %754 = vmatpush1.msra.mxu0 0.0
    %755 = vmatprep.subr.mxu0 0.0
    %756 = vmatpush1.msra.mxu0 0.0
    %757 = vmatprep.subr.mxu0 0.0
    %758 = vmatpush1.msra.mxu0 0.0
    %759 = vmatprep.subr.mxu0 0.0
    %760 = vmatpush1.msra.mxu0 0.0
    %761 = vmatprep.subr.mxu0 0.0
    %762 = vmatpush1.msra.mxu0 0.0
    %763 = vmatprep.subr.mxu0 0.0
    %764 = vmatpush1.msra.mxu0 0.0
    %765 = vmatprep.subr.mxu0 0.0
    %766 = vmatpush1.msra.mxu0 0.0
    %767 = vmatprep.subr.mxu0 0.0
    %768 = vmatpush1.msra.mxu0 0.0
    %769 = vmatprep.subr.mxu0 0.0
    %770 = vmatpush1.msra.mxu0 0.0
    %771 = vmatprep.subr.mxu0 0.0
    %772 = vmatpush1.msra.mxu0 0.0
    %773 = vmatprep.subr.mxu0 0.0
    %774 = vmatpush1.msra.mxu0 0.0
    %775 = vmatprep.subr.mxu0 0.0
    %776 = vmatpush1.msra.mxu0 0.0
    %777 = vmatprep.subr.mxu0 0.0
    %778 = vmatpush1.msra.mxu0 0.0
    %779 = vmatprep.subr.mxu0 0.0
    %780 = vmatpush1.msra.mxu0 0.0
    %781 = vmatprep.subr.mxu0 0.0
    %782 = vmatpush1.msra.mxu0 0.0
    %783 = vmatprep.subr.mxu0 0.0
    %784 = vmatpush1.msra.mxu0 0.0
    %785 = vmatprep.subr.mxu0 0.0
    %786 = vmatpush1.msra.mxu0 0.0
    %787 = vmatprep.subr.mxu0 0.0
    %788 = vmatpush1.msra.mxu0 0.0
    %789 = vmatprep.mubr.f32.mxu0 0.0
    %790 = vmatmul.mubr.f32.gmra.mrb[0].mxu0 %v723
    %v791 = vpop.f32.mrb[0].mxu0
    %v792 = vadd.f32 0.0, %v791
    %v793 = vpop.f32.mrb[0].mxu0
    %794 = vdwg.mxu0
    %v795 = vadd.f32 %v302, %v792
    %v796 = vmul.f32 %v795, %v411
    %v797 = vxor.u32 %v796, 2147483648
    %v798 = vmul.f32 %v797, 1.442695
    %v799 = vpow.pop %v798
    %v800 = vadd.f32 %v799, 1.0
    %v801 = vrcp.pop %v800
    %v802 = vmul.f32 1.0, %v801
    %v803 = vmul.f32 %v802, 2.0
    %v804 = vsub.f32 %v803, 1.0
    %v805 = vmul.f32 %v802, %v713
    %807 = vrot.lane.b32.xlu0 %v804, 64
    %v808 = vpop.permute.xlu0 %807
    %v810 = vmul.f32 %v802, %v808
    %812 = vrot.lane.b32.xlu0 %v810, 32
    %v813 = vpop.permute.xlu0 %812
    %v815 = vadd.f32 %v805, %v813
    %v816 = vtanh.pop %v815
    %818 = vrot.lane.b32.xlu0 %v816, 64
    %v819 = vpop.permute.xlu0 %818
    %v821 = vmul.f32 %v802, %v819
    %823 = vrot.lane.b32.xlu0 %v821, 32
    %v824 = vpop.permute.xlu0 %823
    %v825 = vsel %vm95, %v824, 0
    %827 = vmatprep.subr.mxu0 0.0
    %828 = vmatpush1.msra.mxu0 %v412
    %829 = vmatprep.subr.mxu0 0.0
    %830 = vmatpush1.msra.mxu0 %v413
    %831 = vmatprep.subr.mxu0 0.0
    %832 = vmatpush1.msra.mxu0 %v414
    %833 = vmatprep.subr.mxu0 0.0
    %834 = vmatpush1.msra.mxu0 %v415
    %835 = vmatprep.subr.mxu0 0.0
    %836 = vmatpush1.msra.mxu0 0.0
    %837 = vmatprep.subr.mxu0 0.0
    %838 = vmatpush1.msra.mxu0 0.0
    %839 = vmatprep.subr.mxu0 0.0
    %840 = vmatpush1.msra.mxu0 0.0
    %841 = vmatprep.subr.mxu0 0.0
    %842 = vmatpush1.msra.mxu0 0.0
    %843 = vmatprep.subr.mxu0 0.0
    %844 = vmatpush1.msra.mxu0 0.0
    %845 = vmatprep.subr.mxu0 0.0
    %846 = vmatpush1.msra.mxu0 0.0
    %847 = vmatprep.subr.mxu0 0.0
    %848 = vmatpush1.msra.mxu0 0.0
    %849 = vmatprep.subr.mxu0 0.0
    %850 = vmatpush1.msra.mxu0 0.0
    %851 = vmatprep.subr.mxu0 0.0
    %852 = vmatpush1.msra.mxu0 0.0
    %853 = vmatprep.subr.mxu0 0.0
    %854 = vmatpush1.msra.mxu0 0.0
    %855 = vmatprep.subr.mxu0 0.0
    %856 = vmatpush1.msra.mxu0 0.0
    %857 = vmatprep.subr.mxu0 0.0
    %858 = vmatpush1.msra.mxu0 0.0
    %859 = vmatprep.subr.mxu0 0.0
    %860 = vmatpush1.msra.mxu0 0.0
    %861 = vmatprep.subr.mxu0 0.0
    %862 = vmatpush1.msra.mxu0 0.0
    %863 = vmatprep.subr.mxu0 0.0
    %864 = vmatpush1.msra.mxu0 0.0
    %865 = vmatprep.subr.mxu0 0.0
    %866 = vmatpush1.msra.mxu0 0.0
    %867 = vmatprep.subr.mxu0 0.0
    %868 = vmatpush1.msra.mxu0 0.0
    %869 = vmatprep.subr.mxu0 0.0
    %870 = vmatpush1.msra.mxu0 0.0
    %871 = vmatprep.subr.mxu0 0.0
    %872 = vmatpush1.msra.mxu0 0.0
    %873 = vmatprep.subr.mxu0 0.0
    %874 = vmatpush1.msra.mxu0 0.0
    %875 = vmatprep.subr.mxu0 0.0
    %876 = vmatpush1.msra.mxu0 0.0
    %877 = vmatprep.subr.mxu0 0.0
    %878 = vmatpush1.msra.mxu0 0.0
    %879 = vmatprep.subr.mxu0 0.0
    %880 = vmatpush1.msra.mxu0 0.0
    %881 = vmatprep.subr.mxu0 0.0
    %882 = vmatpush1.msra.mxu0 0.0
    %883 = vmatprep.subr.mxu0 0.0
    %884 = vmatpush1.msra.mxu0 0.0
    %885 = vmatprep.subr.mxu0 0.0
    %886 = vmatpush1.msra.mxu0 0.0
    %887 = vmatprep.subr.mxu0 0.0
    %888 = vmatpush1.msra.mxu0 0.0
    %889 = vmatprep.subr.mxu0 0.0
    %890 = vmatpush1.msra.mxu0 0.0
    %891 = vmatprep.mubr.f32.mxu0 0.0
    %892 = vmatmul.mubr.f32.gmra.mrb[0].mxu0 %v825
    %v893 = vpop.f32.mrb[0].mxu0
    %v894 = vadd.f32 0.0, %v893
    %v895 = vpop.f32.mrb[0].mxu0
    %896 = vdwg.mxu0
    %v897 = vadd.f32 %v307, %v894
    %v898 = vmul.f32 %v897, %v411
    %v899 = vxor.u32 %v898, 2147483648
    %v900 = vmul.f32 %v899, 1.442695
    %v901 = vpow.pop %v900
    %v902 = vadd.f32 %v901, 1.0
    %v903 = vrcp.pop %v902
    %v904 = vmul.f32 1.0, %v903
    %v905 = vmul.f32 %v904, 2.0
    %v906 = vsub.f32 %v905, 1.0
    %v907 = vmul.f32 %v904, %v815
    %909 = vrot.lane.b32.xlu0 %v906, 64
    %v910 = vpop.permute.xlu0 %909
    %v912 = vmul.f32 %v904, %v910
    %914 = vrot.lane.b32.xlu0 %v912, 32
    %v915 = vpop.permute.xlu0 %914
    %v917 = vadd.f32 %v907, %v915
    %v918 = vtanh.pop %v917
    %920 = vrot.lane.b32.xlu0 %v918, 64
    %v921 = vpop.permute.xlu0 %920
    %v923 = vmul.f32 %v904, %v921
    %925 = vrot.lane.b32.xlu0 %v923, 32
    %v926 = vpop.permute.xlu0 %925
    %v927 = vsel %vm95, %v926, 0
    %929 = vmatprep.subr.mxu0 0.0
    %930 = vmatpush1.msra.mxu0 %v412
    %931 = vmatprep.subr.mxu0 0.0
    %932 = vmatpush1.msra.mxu0 %v413
    %933 = vmatprep.subr.mxu0 0.0
    %934 = vmatpush1.msra.mxu0 %v414
    %935 = vmatprep.subr.mxu0 0.0
    %936 = vmatpush1.msra.mxu0 %v415
    %937 = vmatprep.subr.mxu0 0.0
    %938 = vmatpush1.msra.mxu0 0.0
    %939 = vmatprep.subr.mxu0 0.0
    %940 = vmatpush1.msra.mxu0 0.0
    %941 = vmatprep.subr.mxu0 0.0
    %942 = vmatpush1.msra.mxu0 0.0
    %943 = vmatprep.subr.mxu0 0.0
    %944 = vmatpush1.msra.mxu0 0.0
    %945 = vmatprep.subr.mxu0 0.0
    %946 = vmatpush1.msra.mxu0 0.0
    %947 = vmatprep.subr.mxu0 0.0
    %948 = vmatpush1.msra.mxu0 0.0
    %949 = vmatprep.subr.mxu0 0.0
    %950 = vmatpush1.msra.mxu0 0.0
    %951 = vmatprep.subr.mxu0 0.0
    %952 = vmatpush1.msra.mxu0 0.0
    %953 = vmatprep.subr.mxu0 0.0
    %954 = vmatpush1.msra.mxu0 0.0
    %955 = vmatprep.subr.mxu0 0.0
    %956 = vmatpush1.msra.mxu0 0.0
    %957 = vmatprep.subr.mxu0 0.0
    %958 = vmatpush1.msra.mxu0 0.0
    %959 = vmatprep.subr.mxu0 0.0
    %960 = vmatpush1.msra.mxu0 0.0
    %961 = vmatprep.subr.mxu0 0.0
    %962 = vmatpush1.msra.mxu0 0.0
    %963 = vmatprep.subr.mxu0 0.0
    %964 = vmatpush1.msra.mxu0 0.0
    %965 = vmatprep.subr.mxu0 0.0
    %966 = vmatpush1.msra.mxu0 0.0
    %967 = vmatprep.subr.mxu0 0.0
    %968 = vmatpush1.msra.mxu0 0.0
    %969 = vmatprep.subr.mxu0 0.0
    %970 = vmatpush1.msra.mxu0 0.0
    %971 = vmatprep.subr.mxu0 0.0
    %972 = vmatpush1.msra.mxu0 0.0
    %973 = vmatprep.subr.mxu0 0.0
    %974 = vmatpush1.msra.mxu0 0.0
    %975 = vmatprep.subr.mxu0 0.0
    %976 = vmatpush1.msra.mxu0 0.0
    %977 = vmatprep.subr.mxu0 0.0
    %978 = vmatpush1.msra.mxu0 0.0
    %979 = vmatprep.subr.mxu0 0.0
    %980 = vmatpush1.msra.mxu0 0.0
    %981 = vmatprep.subr.mxu0 0.0
    %982 = vmatpush1.msra.mxu0 0.0
    %983 = vmatprep.subr.mxu0 0.0
    %984 = vmatpush1.msra.mxu0 0.0
    %985 = vmatprep.subr.mxu0 0.0
    %986 = vmatpush1.msra.mxu0 0.0
    %987 = vmatprep.subr.mxu0 0.0
    %988 = vmatpush1.msra.mxu0 0.0
    %989 = vmatprep.subr.mxu0 0.0
    %990 = vmatpush1.msra.mxu0 0.0
    %991 = vmatprep.subr.mxu0 0.0
    %992 = vmatpush1.msra.mxu0 0.0
    %993 = vmatprep.mubr.f32.mxu0 0.0
    %994 = vmatmul.mubr.f32.gmra.mrb[0].mxu0 %v927
    %v995 = vpop.f32.mrb[0].mxu0
    %v996 = vadd.f32 0.0, %v995
    %v997 = vpop.f32.mrb[0].mxu0
    %998 = vdwg.mxu0
    %v999 = vadd.f32 %v312, %v996
    %v1000 = vmul.f32 %v999, %v411
    %v1001 = vxor.u32 %v1000, 2147483648
    %v1002 = vmul.f32 %v1001, 1.442695
    %v1003 = vpow.pop %v1002
    %v1004 = vadd.f32 %v1003, 1.0
    %v1005 = vrcp.pop %v1004
    %v1006 = vmul.f32 1.0, %v1005
    %v1007 = vmul.f32 %v1006, 2.0
    %v1008 = vsub.f32 %v1007, 1.0
    %v1009 = vmul.f32 %v1006, %v917
    %1011 = vrot.lane.b32.xlu0 %v1008, 64
    %v1012 = vpop.permute.xlu0 %1011
    %v1014 = vmul.f32 %v1006, %v1012
    %1016 = vrot.lane.b32.xlu0 %v1014, 32
    %v1017 = vpop.permute.xlu0 %1016
    %v1019 = vadd.f32 %v1009, %v1017
    %v1020 = vtanh.pop %v1019
    %1022 = vrot.lane.b32.xlu0 %v1020, 64
    %v1023 = vpop.permute.xlu0 %1022
    %v1025 = vmul.f32 %v1006, %v1023
    %1027 = vrot.lane.b32.xlu0 %v1025, 32
    %v1028 = vpop.permute.xlu0 %1027
    %v1029 = vsel %vm95, %v1028, 0
    %1031 = vmatprep.subr.mxu0 0.0
    %1032 = vmatpush1.msra.mxu0 %v412
    %1033 = vmatprep.subr.mxu0 0.0
    %1034 = vmatpush1.msra.mxu0 %v413
    %1035 = vmatprep.subr.mxu0 0.0
    %1036 = vmatpush1.msra.mxu0 %v414
    %1037 = vmatprep.subr.mxu0 0.0
    %1038 = vmatpush1.msra.mxu0 %v415
    %1039 = vmatprep.subr.mxu0 0.0
    %1040 = vmatpush1.msra.mxu0 0.0
    %1041 = vmatprep.subr.mxu0 0.0
    %1042 = vmatpush1.msra.mxu0 0.0
    %1043 = vmatprep.subr.mxu0 0.0
    %1044 = vmatpush1.msra.mxu0 0.0
    %1045 = vmatprep.subr.mxu0 0.0
    %1046 = vmatpush1.msra.mxu0 0.0
    %1047 = vmatprep.subr.mxu0 0.0
    %1048 = vmatpush1.msra.mxu0 0.0
    %1049 = vmatprep.subr.mxu0 0.0
    %1050 = vmatpush1.msra.mxu0 0.0
    %1051 = vmatprep.subr.mxu0 0.0
    %1052 = vmatpush1.msra.mxu0 0.0
    %1053 = vmatprep.subr.mxu0 0.0
    %1054 = vmatpush1.msra.mxu0 0.0
    %1055 = vmatprep.subr.mxu0 0.0
    %1056 = vmatpush1.msra.mxu0 0.0
    %1057 = vmatprep.subr.mxu0 0.0
    %1058 = vmatpush1.msra.mxu0 0.0
    %1059 = vmatprep.subr.mxu0 0.0
    %1060 = vmatpush1.msra.mxu0 0.0
    %1061 = vmatprep.subr.mxu0 0.0
    %1062 = vmatpush1.msra.mxu0 0.0
    %1063 = vmatprep.subr.mxu0 0.0
    %1064 = vmatpush1.msra.mxu0 0.0
    %1065 = vmatprep.subr.mxu0 0.0
    %1066 = vmatpush1.msra.mxu0 0.0
    %1067 = vmatprep.subr.mxu0 0.0
    %1068 = vmatpush1.msra.mxu0 0.0
    %1069 = vmatprep.subr.mxu0 0.0
    %1070 = vmatpush1.msra.mxu0 0.0
    %1071 = vmatprep.subr.mxu0 0.0
    %1072 = vmatpush1.msra.mxu0 0.0
    %1073 = vmatprep.subr.mxu0 0.0
    %1074 = vmatpush1.msra.mxu0 0.0
    %1075 = vmatprep.subr.mxu0 0.0
    %1076 = vmatpush1.msra.mxu0 0.0
    %1077 = vmatprep.subr.mxu0 0.0
    %1078 = vmatpush1.msra.mxu0 0.0
    %1079 = vmatprep.subr.mxu0 0.0
    %1080 = vmatpush1.msra.mxu0 0.0
    %1081 = vmatprep.subr.mxu0 0.0
    %1082 = vmatpush1.msra.mxu0 0.0
    %1083 = vmatprep.subr.mxu0 0.0
    %1084 = vmatpush1.msra.mxu0 0.0
    %1085 = vmatprep.subr.mxu0 0.0
    %1086 = vmatpush1.msra.mxu0 0.0
    %1087 = vmatprep.subr.mxu0 0.0
    %1088 = vmatpush1.msra.mxu0 0.0
    %1089 = vmatprep.subr.mxu0 0.0
    %1090 = vmatpush1.msra.mxu0 0.0
    %1091 = vmatprep.subr.mxu0 0.0
    %1092 = vmatpush1.msra.mxu0 0.0
    %1093 = vmatprep.subr.mxu0 0.0
    %1094 = vmatpush1.msra.mxu0 0.0
    %1095 = vmatprep.mubr.f32.mxu0 0.0
    %1096 = vmatmul.mubr.f32.gmra.mrb[0].mxu0 %v1029
    %v1097 = vpop.f32.mrb[0].mxu0
    %v1098 = vadd.f32 0.0, %v1097
    %v1099 = vpop.f32.mrb[0].mxu0
    %1100 = vdwg.mxu0
    %v1101 = vadd.f32 %v317, %v1098
    %v1102 = vmul.f32 %v1101, %v411
    %v1103 = vxor.u32 %v1102, 2147483648
    %v1104 = vmul.f32 %v1103, 1.442695
    %v1105 = vpow.pop %v1104
    %v1106 = vadd.f32 %v1105, 1.0
    %v1107 = vrcp.pop %v1106
    %v1108 = vmul.f32 1.0, %v1107
    %v1109 = vmul.f32 %v1108, 2.0
    %v1110 = vsub.f32 %v1109, 1.0
    %v1111 = vmul.f32 %v1108, %v1019
    %1113 = vrot.lane.b32.xlu0 %v1110, 64
    %v1114 = vpop.permute.xlu0 %1113
    %v1116 = vmul.f32 %v1108, %v1114
    %1118 = vrot.lane.b32.xlu0 %v1116, 32
    %v1119 = vpop.permute.xlu0 %1118
    %v1121 = vadd.f32 %v1111, %v1119
    %v1122 = vtanh.pop %v1121
    %1124 = vrot.lane.b32.xlu0 %v1122, 64
    %v1125 = vpop.permute.xlu0 %1124
    %v1127 = vmul.f32 %v1108, %v1125
    %1129 = vrot.lane.b32.xlu0 %v1127, 32
    %v1130 = vpop.permute.xlu0 %1129
    %v1131 = vsel %vm95, %v1130, 0
    %1133 = vmatprep.subr.mxu0 0.0
    %1134 = vmatpush1.msra.mxu0 %v412
    %1135 = vmatprep.subr.mxu0 0.0
    %1136 = vmatpush1.msra.mxu0 %v413
    %1137 = vmatprep.subr.mxu0 0.0
    %1138 = vmatpush1.msra.mxu0 %v414
    %1139 = vmatprep.subr.mxu0 0.0
    %1140 = vmatpush1.msra.mxu0 %v415
    %1141 = vmatprep.subr.mxu0 0.0
    %1142 = vmatpush1.msra.mxu0 0.0
    %1143 = vmatprep.subr.mxu0 0.0
    %1144 = vmatpush1.msra.mxu0 0.0
    %1145 = vmatprep.subr.mxu0 0.0
    %1146 = vmatpush1.msra.mxu0 0.0
    %1147 = vmatprep.subr.mxu0 0.0
    %1148 = vmatpush1.msra.mxu0 0.0
    %1149 = vmatprep.subr.mxu0 0.0
    %1150 = vmatpush1.msra.mxu0 0.0
    %1151 = vmatprep.subr.mxu0 0.0
    %1152 = vmatpush1.msra.mxu0 0.0
    %1153 = vmatprep.subr.mxu0 0.0
    %1154 = vmatpush1.msra.mxu0 0.0
    %1155 = vmatprep.subr.mxu0 0.0
    %1156 = vmatpush1.msra.mxu0 0.0
    %1157 = vmatprep.subr.mxu0 0.0
    %1158 = vmatpush1.msra.mxu0 0.0
    %1159 = vmatprep.subr.mxu0 0.0
    %1160 = vmatpush1.msra.mxu0 0.0
    %1161 = vmatprep.subr.mxu0 0.0
    %1162 = vmatpush1.msra.mxu0 0.0
    %1163 = vmatprep.subr.mxu0 0.0
    %1164 = vmatpush1.msra.mxu0 0.0
    %1165 = vmatprep.subr.mxu0 0.0
    %1166 = vmatpush1.msra.mxu0 0.0
    %1167 = vmatprep.subr.mxu0 0.0
    %1168 = vmatpush1.msra.mxu0 0.0
    %1169 = vmatprep.subr.mxu0 0.0
    %1170 = vmatpush1.msra.mxu0 0.0
    %1171 = vmatprep.subr.mxu0 0.0
    %1172 = vmatpush1.msra.mxu0 0.0
    %1173 = vmatprep.subr.mxu0 0.0
    %1174 = vmatpush1.msra.mxu0 0.0
    %1175 = vmatprep.subr.mxu0 0.0
    %1176 = vmatpush1.msra.mxu0 0.0
    %1177 = vmatprep.subr.mxu0 0.0
    %1178 = vmatpush1.msra.mxu0 0.0
    %1179 = vmatprep.subr.mxu0 0.0
    %1180 = vmatpush1.msra.mxu0 0.0
    %1181 = vmatprep.subr.mxu0 0.0
    %1182 = vmatpush1.msra.mxu0 0.0
    %1183 = vmatprep.subr.mxu0 0.0
    %1184 = vmatpush1.msra.mxu0 0.0
    %1185 = vmatprep.subr.mxu0 0.0
    %1186 = vmatpush1.msra.mxu0 0.0
    %1187 = vmatprep.subr.mxu0 0.0
    %1188 = vmatpush1.msra.mxu0 0.0
    %1189 = vmatprep.subr.mxu0 0.0
    %1190 = vmatpush1.msra.mxu0 0.0
    %1191 = vmatprep.subr.mxu0 0.0
    %1192 = vmatpush1.msra.mxu0 0.0
    %1193 = vmatprep.subr.mxu0 0.0
    %1194 = vmatpush1.msra.mxu0 0.0
    %1195 = vmatprep.subr.mxu0 0.0
    %1196 = vmatpush1.msra.mxu0 0.0
    %1197 = vmatprep.mubr.f32.mxu0 0.0
    %1198 = vmatmul.mubr.f32.gmra.mrb[0].mxu0 %v1131
    %v1199 = vpop.f32.mrb[0].mxu0
    %v1200 = vadd.f32 0.0, %v1199
    %v1201 = vpop.f32.mrb[0].mxu0
    %1202 = vdwg.mxu0
    %v1203 = vadd.f32 %v322, %v1200
    %v1204 = vmul.f32 %v1203, %v411
    %v1205 = vxor.u32 %v1204, 2147483648
    %v1206 = vmul.f32 %v1205, 1.442695
    %v1207 = vpow.pop %v1206
    %v1208 = vadd.f32 %v1207, 1.0
    %v1209 = vrcp.pop %v1208
    %v1210 = vmul.f32 1.0, %v1209
    %v1211 = vmul.f32 %v1210, 2.0
    %v1212 = vsub.f32 %v1211, 1.0
    %v1213 = vmul.f32 %v1210, %v1121
    %1215 = vrot.lane.b32.xlu0 %v1212, 64
    %v1216 = vpop.permute.xlu0 %1215
    %v1218 = vmul.f32 %v1210, %v1216
    %1220 = vrot.lane.b32.xlu0 %v1218, 32
    %v1221 = vpop.permute.xlu0 %1220
    %v1223 = vadd.f32 %v1213, %v1221
    %v1224 = vtanh.pop %v1223
    %1226 = vrot.lane.b32.xlu0 %v1224, 64
    %v1227 = vpop.permute.xlu0 %1226
    %v1229 = vmul.f32 %v1210, %v1227
    %v1230 = vmul.f32 %v403, %v411
    %v1231 = vxor.u32 %v1230, 2147483648
    %v1232 = vmul.f32 %v1231, 1.442695
    %v1233 = vpow.pop %v1232
    %v1234 = vadd.f32 %v1233, 1.0
    %v1235 = vrcp.pop %v1234
    %v1236 = vmul.f32 1.0, %v1235
    %v1237 = vmul.f32 %v1236, 2.0
    %v1238 = vsub.f32 %v1237, 1.0
    %1240 = vrot.lane.b32.xlu0 %v1238, 64
    %v1241 = vpop.permute.xlu0 %1240
    %v1243 = vmul.f32 %v1236, %v1241
    %v1244 = vtanh.pop %v1243
    %1246 = vrot.lane.b32.xlu0 %v1244, 96
    %v1247 = vpop.permute.xlu0 %1246
    %v1249 = vmul.f32 %v1236, %v1247
    %v1250 = vld [vmem:[%s7] sm:$0xff]
    %v1251 = vld [vmem:[%s7 + $0x8] sm:$0xff]
    %v1252 = vld [vmem:[%s7 + $0x10] sm:$0xff]
    %v1253 = vld [vmem:[%s7 + $0x18] sm:$0xff]
    %v1254 = vld [vmem:[%s7 + $0x20] sm:$0xff]
    %v1255 = vld [vmem:[%s7 + $0x28] sm:$0xff]
    %v1256 = vld [vmem:[%s7 + $0x30] sm:$0xff]
    %v1257 = vld [vmem:[%s7 + $0x38] sm:$0xff]
    %1259 = vrot.lane.b32.xlu0 %v1249, 32
    %v1260 = vpop.permute.xlu0 %1259
    %v1261 = vsel %vm95, %v1260, 0
    %1263 = vmatprep.subr.mxu0 0.0
    %1264 = vmatpush1.msra.mxu0 %v1254
    %1265 = vmatprep.subr.mxu0 0.0
    %1266 = vmatpush1.msra.mxu0 %v1255
    %1267 = vmatprep.subr.mxu0 0.0
    %1268 = vmatpush1.msra.mxu0 %v1256
    %1269 = vmatprep.subr.mxu0 0.0
    %1270 = vmatpush1.msra.mxu0 %v1257
    %1271 = vmatprep.subr.mxu0 0.0
    %1272 = vmatpush1.msra.mxu0 0.0
    %1273 = vmatprep.subr.mxu0 0.0
    %1274 = vmatpush1.msra.mxu0 0.0
    %1275 = vmatprep.subr.mxu0 0.0
    %1276 = vmatpush1.msra.mxu0 0.0
    %1277 = vmatprep.subr.mxu0 0.0
    %1278 = vmatpush1.msra.mxu0 0.0
    %1279 = vmatprep.subr.mxu0 0.0
    %1280 = vmatpush1.msra.mxu0 0.0
    %1281 = vmatprep.subr.mxu0 0.0
    %1282 = vmatpush1.msra.mxu0 0.0
    %1283 = vmatprep.subr.mxu0 0.0
    %1284 = vmatpush1.msra.mxu0 0.0
    %1285 = vmatprep.subr.mxu0 0.0
    %1286 = vmatpush1.msra.mxu0 0.0
    %1287 = vmatprep.subr.mxu0 0.0
    %1288 = vmatpush1.msra.mxu0 0.0
    %1289 = vmatprep.subr.mxu0 0.0
    %1290 = vmatpush1.msra.mxu0 0.0
    %1291 = vmatprep.subr.mxu0 0.0
    %1292 = vmatpush1.msra.mxu0 0.0
    %1293 = vmatprep.subr.mxu0 0.0
    %1294 = vmatpush1.msra.mxu0 0.0
    %1295 = vmatprep.subr.mxu0 0.0
    %1296 = vmatpush1.msra.mxu0 0.0
    %1297 = vmatprep.subr.mxu0 0.0
    %1298 = vmatpush1.msra.mxu0 0.0
    %1299 = vmatprep.subr.mxu0 0.0
    %1300 = vmatpush1.msra.mxu0 0.0
    %1301 = vmatprep.subr.mxu0 0.0
    %1302 = vmatpush1.msra.mxu0 0.0
    %1303 = vmatprep.subr.mxu0 0.0
    %1304 = vmatpush1.msra.mxu0 0.0
    %1305 = vmatprep.subr.mxu0 0.0
    %1306 = vmatpush1.msra.mxu0 0.0
    %1307 = vmatprep.subr.mxu0 0.0
    %1308 = vmatpush1.msra.mxu0 0.0
    %1309 = vmatprep.subr.mxu0 0.0
    %1310 = vmatpush1.msra.mxu0 0.0
    %1311 = vmatprep.subr.mxu0 0.0
    %1312 = vmatpush1.msra.mxu0 0.0
    %1313 = vmatprep.subr.mxu0 0.0
    %1314 = vmatpush1.msra.mxu0 0.0
    %1315 = vmatprep.subr.mxu0 0.0
    %1316 = vmatpush1.msra.mxu0 0.0
    %1317 = vmatprep.subr.mxu0 0.0
    %1318 = vmatpush1.msra.mxu0 0.0
    %1319 = vmatprep.subr.mxu0 0.0
    %1320 = vmatpush1.msra.mxu0 0.0
    %1321 = vmatprep.subr.mxu0 0.0
    %1322 = vmatpush1.msra.mxu0 0.0
    %1323 = vmatprep.subr.mxu0 0.0
    %1324 = vmatpush1.msra.mxu0 0.0
    %1325 = vmatprep.subr.mxu0 0.0
    %1326 = vmatpush1.msra.mxu0 0.0
    %1327 = vmatprep.mubr.f32.mxu0 0.0
    %1328 = vmatmul.mubr.f32.gmra.mrb[0].mxu0 %v1261
    %v1329 = vpop.f32.mrb[0].mxu0
    %v1330 = vadd.f32 0.0, %v1329
    %v1331 = vpop.f32.mrb[0].mxu0
    %1332 = vdwg.mxu0
    %1334 = vrot.lane.b32.xlu0 %v1229, 32
    %v1335 = vpop.permute.xlu0 %1334
    %v1336 = vsel %vm95, %v1335, 0
    %1338 = vmatprep.subr.mxu0 0.0
    %1339 = vmatpush1.msra.mxu0 %v1250
    %1340 = vmatprep.subr.mxu0 0.0
    %1341 = vmatpush1.msra.mxu0 %v1251
    %1342 = vmatprep.subr.mxu0 0.0
    %1343 = vmatpush1.msra.mxu0 %v1252
    %1344 = vmatprep.subr.mxu0 0.0
    %1345 = vmatpush1.msra.mxu0 %v1253
    %1346 = vmatprep.subr.mxu0 0.0
    %1347 = vmatpush1.msra.mxu0 0.0
    %1348 = vmatprep.subr.mxu0 0.0
    %1349 = vmatpush1.msra.mxu0 0.0
    %1350 = vmatprep.subr.mxu0 0.0
    %1351 = vmatpush1.msra.mxu0 0.0
    %1352 = vmatprep.subr.mxu0 0.0
    %1353 = vmatpush1.msra.mxu0 0.0
    %1354 = vmatprep.subr.mxu0 0.0
    %1355 = vmatpush1.msra.mxu0 0.0
    %1356 = vmatprep.subr.mxu0 0.0
    %1357 = vmatpush1.msra.mxu0 0.0
    %1358 = vmatprep.subr.mxu0 0.0
    %1359 = vmatpush1.msra.mxu0 0.0
    %1360 = vmatprep.subr.mxu0 0.0
    %1361 = vmatpush1.msra.mxu0 0.0
    %1362 = vmatprep.subr.mxu0 0.0
    %1363 = vmatpush1.msra.mxu0 0.0
    %1364 = vmatprep.subr.mxu0 0.0
    %1365 = vmatpush1.msra.mxu0 0.0
    %1366 = vmatprep.subr.mxu0 0.0
    %1367 = vmatpush1.msra.mxu0 0.0
    %1368 = vmatprep.subr.mxu0 0.0
    %1369 = vmatpush1.msra.mxu0 0.0
    %1370 = vmatprep.subr.mxu0 0.0
    %1371 = vmatpush1.msra.mxu0 0.0
    %1372 = vmatprep.subr.mxu0 0.0
    %1373 = vmatpush1.msra.mxu0 0.0
    %1374 = vmatprep.subr.mxu0 0.0
    %1375 = vmatpush1.msra.mxu0 0.0
    %1376 = vmatprep.subr.mxu0 0.0
    %1377 = vmatpush1.msra.mxu0 0.0
    %1378 = vmatprep.subr.mxu0 0.0
    %1379 = vmatpush1.msra.mxu0 0.0
    %1380 = vmatprep.subr.mxu0 0.0
    %1381 = vmatpush1.msra.mxu0 0.0
    %1382 = vmatprep.subr.mxu0 0.0
    %1383 = vmatpush1.msra.mxu0 0.0
    %1384 = vmatprep.subr.mxu0 0.0
    %1385 = vmatpush1.msra.mxu0 0.0
    %1386 = vmatprep.subr.mxu0 0.0
    %1387 = vmatpush1.msra.mxu0 0.0
    %1388 = vmatprep.subr.mxu0 0.0
    %1389 = vmatpush1.msra.mxu0 0.0
    %1390 = vmatprep.subr.mxu0 0.0
    %1391 = vmatpush1.msra.mxu0 0.0
    %1392 = vmatprep.subr.mxu0 0.0
    %1393 = vmatpush1.msra.mxu0 0.0
    %1394 = vmatprep.subr.mxu0 0.0
    %1395 = vmatpush1.msra.mxu0 0.0
    %1396 = vmatprep.subr.mxu0 0.0
    %1397 = vmatpush1.msra.mxu0 0.0
    %1398 = vmatprep.subr.mxu0 0.0
    %1399 = vmatpush1.msra.mxu0 0.0
    %1400 = vmatprep.subr.mxu0 0.0
    %1401 = vmatpush1.msra.mxu0 0.0
    %1402 = vmatprep.mubr.f32.mxu0 0.0
    %1403 = vmatmul.mubr.f32.gmra.mrb[0].mxu0 %v1336
    %v1404 = vpop.f32.mrb[0].mxu0
    %v1405 = vadd.f32 %v1330, %v1404
    %v1406 = vpop.f32.mrb[0].mxu0
    %1407 = vdwg.mxu0
    %v1408 = vld [vmem:[#allocation11] sm:$0x1]
    %v1410 = vlaneseq
    %v1411 = vshrl.u32 %v1410, 7
    %v1412 = vsub.s32 0, %v1411
    %v1413 = vrot.slane %v1408, %v1412
    %v1415 = vadd.f32 %v1405, %v1413
    %vm1416 = vcmask 130048
    %v1417 = vsel %vm1416, %v1415, -inf
    %1418 = vmax.xlane.f32.xlu0 %v1417
    %v1419 = vpop.xlane.xlu0 %1418
    %v1420 = vsub.f32 %v1415, %v1419
    %v1421 = vmul.f32 %v1420, 1.442695
    %v1422 = vpow.pop %v1421
    %v1423 = vsel %vm1416, %v1422, 0.0
    %1424 = vadd.xlane.f32.xlu0 %v1423
    %v1425 = vpop.xlane.xlu0 %1424
    %v1426 = vlog2.pop %v1425
    %v1427 = vmul.f32 %v1426, 0.6931472
    %v1428 = vsub.f32 %v1420, %v1427
    %vm1429 = vcmask 123904
    %1430 = vst.msk [vmem:[#allocation13] sm:$0x3] %vm1429, %v1428
    // Predicated region
    $region58: #{macnet_forward.1} parent=1 // pred_check
      _
    $region59: #{macnet_forward.1} parent=1 // pred_check_branch
      %1432 = sbr.rel (0) target = $region61
    $region60: #{macnet_forward.1} parent=1 // pred_region
      %s1434 = ssub.s32 32, 32
      %1435 = vsyncadd [#allocation5], %s1434
      %s1437 = sshll.u32 [#allocation13], 4
      %s1438 = int_to_ptr.vmem [resolvable:$true] %s1437
      %1440 = dma.vmem_to_hbm [thread:$0]  %s1438, 32, %s9, [#allocation5]
    $region61: #{macnet_forward.1} parent=1 // pred_fallthru
      _
    // Predicated region
    $region62: #{macnet_forward.1} parent=1 // pred_check
      _
    $region63: #{macnet_forward.1} parent=1 // pred_check_branch
      %1442 = sbr.rel (0) target = $region65
    $region64: #{macnet_forward.1} parent=1 // pred_region
      %1443 = dma.done [#allocation5], 32
    $region65: #{macnet_forward.1} parent=1 // pred_fallthru
      _
    %1444 = vsyncpa [#allocation4], 1
    %1445 = vsyncpa [#allocation9], 1
    %1446 = vsyncpa [#allocation12], 1
    %1447 = vsyncpa [#allocation5], 1
    %1448 = vsyncpa [#allocation6], 1

</llo_original>
